<compile_context>
chip_gen: v5e
topology: v5e:2x2
jax: 0.10.0
libtpu: 0.0.40
codegen_flags: <defaults>
</compile_context>

<pallas_src>
import functools

import jax
import jax.numpy as jnp
from jax import lax
from jax.experimental import pallas as pl
from jax.experimental.pallas import tpu as pltpu


def _device_kind():
    try:
        return jax.devices()[0].device_kind.lower()
    except Exception:
        return ""


def _vmem_limit_bytes():
    """Per-generation VMEM grant: big tiles on v5e/v6e (128 MiB physical), capped
    on v7x (64 MiB physical per TensorCore), conservative fallback elsewhere."""
    kind = _device_kind()
    if "v7" in kind:
        return 48 * 1024 * 1024
    if "v5" in kind or "v6" in kind:
        return 96 * 1024 * 1024
    try:
        cap = int(pltpu.get_tpu_info().vmem_capacity_bytes)
        return max(32 * 1024 * 1024, min(96 * 1024 * 1024, (cap * 3) // 4))
    except Exception:
        return 32 * 1024 * 1024


def _mac_dtype(x_dtype):
    """bf16 MAC (f32 accumulate) only for bf16 inputs on chips with a bf16 VALU."""
    if x_dtype != jnp.bfloat16:
        return jnp.float32
    kind = _device_kind()
    if "v6" in kind or "v7" in kind:
        return jnp.bfloat16
    return jnp.float32  # v5e and older: no bf16 VALU -> keep the f32 path


def _pick_batch_block(n):
    # Fill the 8 sublanes.  For N >= 16 this already yields >= 2 "parallel" batch
    # grid steps, so v7x's two TensorCores split the batch without losing density.
    return min(8, n)


def _pick_channel_block(c, nb, hw_pad, x_itemsize, out_itemsize, mask_bytes,
                        vmem_limit):
    """Channels per grid step, sized against the VMEM limit actually granted."""
    fixed = 2 * nb * hw_pad * out_itemsize      # output block (double-buffered)
    fixed += 2 * nb * hw_pad * 4                # sum/max f32 scratch
    fixed += 2 * mask_bytes                     # weight-mask planes (double-buffered)
    headroom = 8 * nb * hw_pad * 4 + (2 << 20)  # finalize temporaries + slack
    per_channel = 2 * nb * hw_pad * x_itemsize  # double-buffered input slab / channel
    budget = vmem_limit - fixed - headroom
    max_ct = max(8, budget // per_channel)
    if c <= max_ct:
        return c
    return min(c, max(8, (max_ct // 8) * 8))


def spatial_attention_kernel(wm_ref, x_ref, o_ref, sum_ref, max_ref,
                             *, K, W, C, mac_dtype):
    # wm_ref : VMEM (2*K*K, HWp)  weight-mask tap planes (avg taps then max taps)
    # x_ref  : VMEM (Nb, Ct, HWp) input block (batch x channel-tile x flat spatial)
    # o_ref  : VMEM (Nb, 1, HWp)  output block (lane-dense flat spatial)
    # sum_ref/max_ref: VMEM (Nb, HWp) running channel sum / max (f32 scratch)
    pad = K // 2
    nb, ct, hw_pad = x_ref.shape
    c_idx = pl.program_id(1)
    num_c = pl.num_programs(1)

    @pl.when(c_idx == 0)
    def _init():
        sum_ref[...] = jnp.zeros_like(sum_ref)
        max_ref[...] = jnp.full_like(max_ref, -jnp.inf)

    # Running channel reduction for this channel tile (accumulate in f32).
    x = x_ref[...].astype(jnp.float32)                        # (Nb, Ct, HWp)
    if C % ct != 0:
        # Last channel tile reads past C: mask the padded channels (trace-time
        # branch; adds no ops when Ct divides C).
        ch = c_idx * ct + lax.broadcasted_iota(jnp.int32, x.shape, 1)
        in_range = ch < C
        x_sum = jnp.where(in_range, x, 0.0)
        x_max = jnp.where(in_range, x, -jnp.inf)
    else:
        x_sum, x_max = x, x
    sum_ref[...] = sum_ref[...] + jnp.sum(x_sum, axis=1)
    max_ref[...] = jnp.maximum(max_ref[...], jnp.max(x_max, axis=1))

    # Finalize on the last channel step: mean, KxK conv (shift-and-MAC on the VPU
    # with two-stage pltpu.roll shifts on the XLU), sigmoid, lane-dense store.
    @pl.when(c_idx == num_c - 1)
    def _finalize():
        avg = (sum_ref[...] * (1.0 / C)).astype(mac_dtype)    # (Nb, HWp)
        mx = max_ref[...].astype(mac_dtype)                   # (Nb, HWp)

        acc = jnp.zeros((nb, hw_pad), jnp.float32)
        for di in range(K):
            s_row = (di - pad) * W
            if s_row:
                avg_r = pltpu.roll(avg, (-s_row) % hw_pad, 1)
                mx_r = pltpu.roll(mx, (-s_row) % hw_pad, 1)
            else:
                avg_r, mx_r = avg, mx
            for dj in range(K):
                s_col = dj - pad
                if s_col:
                    sh_a = pltpu.roll(avg_r, (-s_col) % hw_pad, 1)
                    sh_m = pltpu.roll(mx_r, (-s_col) % hw_pad, 1)
                else:
                    sh_a, sh_m = avg_r, mx_r
                tap = di * K + dj
                w_avg = wm_ref[pl.ds(tap, 1), :]              # (1, HWp), weight*mask
                w_max = wm_ref[pl.ds(K * K + tap, 1), :]
                # f32 accumulate (promotion); multiplies run in mac_dtype.
                acc = acc + w_avg * sh_a + w_max * sh_m

        o_ref[...] = jax.nn.sigmoid(acc)[:, None, :].astype(o_ref.dtype)


def spatial_attention(x, weight, kernel_size=7, *, batch_block=None,
                      channel_block=None):
    """x: (N, C, H, W); weight: (1, 2, K, K) as in nn.Conv2d(2, 1, K, bias=False)."""
    N, C, H, W = x.shape
    K = kernel_size
    assert K % 2 == 1, "kernel_size must be odd to match PyTorch padding=K//2 / SAME"
    assert weight.shape == (1, 2, K, K)
    pad = K // 2
    HW = H * W
    HW_pad = ((HW + 127) // 128) * 128        # lane-dense (multiple of 128) spatial axis

    mac_dt = _mac_dtype(x.dtype)
    vmem_limit = _vmem_limit_bytes()

    # Precomputed weight-mask tap planes: mask(p; di, dj) * weight[plane, di, dj].
    # The mask reproduces the SAME zero padding (and zeroes the HW_pad lanes), so
    # the in-kernel conv is a pure multiply-accumulate of rolled planes.
    pos = jnp.arange(HW_pad, dtype=jnp.int32)
    hh = pos // W
    ww = pos % W
    valid = pos < HW
    w_f32 = weight.astype(jnp.float32)
    planes = []
    for plane in range(2):                    # 0 -> mean plane, 1 -> max plane
        for di in range(K):
            for dj in range(K):
                ok = ((hh >= pad - di) & (hh < H + pad - di) &
                      (ww >= pad - dj) & (ww < W + pad - dj) & valid)
                planes.append(jnp.where(ok, w_f32[0, plane, di, dj], 0.0))
    wmask = jnp.stack(planes).astype(mac_dt)  # (2*K*K, HW_pad)

    # Lane-dense flattened input (pad copy only when H*W is not a 128-multiple).
    x_flat = x.reshape(N, C, HW)
    if HW_pad != HW:
        x_flat = jnp.pad(x_flat, ((0, 0), (0, 0), (0, HW_pad - HW)))

    Nb = min(N, batch_block) if batch_block is not None else _pick_batch_block(N)
    if channel_block is not None:
        Ct = min(C, channel_block)            # should be a multiple of 8 or == C
    else:
        Ct = _pick_channel_block(
            C, Nb, HW_pad, x.dtype.itemsize, x.dtype.itemsize,
            wmask.size * wmask.dtype.itemsize, vmem_limit)
    grid = (pl.cdiv(N, Nb), pl.cdiv(C, Ct))   # (batch blocks, channel blocks)

    kern = functools.partial(spatial_attention_kernel, K=K, W=W, C=C,
                             mac_dtype=mac_dt)
    out_flat = pl.pallas_call(
        kern,
        out_shape=jax.ShapeDtypeStruct((N, 1, HW_pad), x.dtype),
        grid=grid,
        in_specs=[
            pl.BlockSpec((2 * K * K, HW_pad), lambda b, c: (0, 0)),   # weight-mask planes
            pl.BlockSpec((Nb, Ct, HW_pad), lambda b, c: (b, c, 0)),   # input tile
        ],
        out_specs=pl.BlockSpec((Nb, 1, HW_pad), lambda b, c: (b, 0, 0)),
        scratch_shapes=[
            pltpu.VMEM((Nb, HW_pad), jnp.float32),   # running channel sum
            pltpu.VMEM((Nb, HW_pad), jnp.float32),   # running channel max
        ],
        compiler_params=pltpu.CompilerParams(
            dimension_semantics=("parallel", "arbitrary"),
            vmem_limit_bytes=vmem_limit),
    )(wmask, x_flat)
    return out_flat[:, :, :HW].reshape(N, 1, H, W)


def spatial_attention_reference(x, weight):
    avg = jnp.mean(x, axis=1, keepdims=True)
    mx = jnp.max(x, axis=1, keepdims=True)
    att = jnp.concatenate([avg, mx], axis=1)
    out = lax.conv_general_dilated(
        att, weight, window_strides=(1, 1), padding="SAME",
        dimension_numbers=("NCHW", "OIHW", "NCHW"))
    return jax.nn.sigmoid(out)


if __name__ == "__main__":
    key = jax.random.PRNGKey(0)
    kx, kw, kx2, kw2 = jax.random.split(key, 4)

    # Primary check at the shapes implied by conv_block / CBAM usage.
    N, C, H, W = 2, 4, 16, 16
    K = 7
    x = jax.random.normal(kx, (N, C, H, W), dtype=jnp.float32)
    fan_in = 2 * K * K
    bound = 1.0 / jnp.sqrt(jnp.float32(fan_in))
    weight = jax.random.uniform(kw, (1, 2, K, K), jnp.float32, -bound, bound)

    out = jax.block_until_ready(spatial_attention(x, weight, kernel_size=K))
    ref = jax.block_until_ready(spatial_attention_reference(x, weight))
    assert out.shape == (N, 1, H, W)
    assert jnp.allclose(out, ref, rtol=1e-5, atol=1e-5), "mismatch vs reference"

    # Remainder / lane-padding check: non-divisible N and C, H*W not a 128-multiple.
    N2, C2, H2, W2 = 3, 10, 10, 10
    x2 = jax.random.normal(kx2, (N2, C2, H2, W2), dtype=jnp.float32)
    weight2 = jax.random.uniform(kw2, (1, 2, K, K), jnp.float32, -bound, bound)
    out2 = jax.block_until_ready(
        spatial_attention(x2, weight2, kernel_size=K, batch_block=2, channel_block=8))
    ref2 = jax.block_until_ready(spatial_attention_reference(x2, weight2))
    assert out2.shape == (N2, 1, H2, W2)
    assert jnp.allclose(out2, ref2, rtol=1e-5, atol=1e-5), "mismatch vs reference (ragged)"

    print("KERNEL_OK")
</pallas_src>

<mosaic_0001>
module attributes {stable_mosaic.version = 11 : i64} {
  func.func @spatial_attention_kernel(%arg0: i32, %arg1: i32, %arg2: memref<98x256xf32, #tpu.memory_space<vmem>>, %arg3: memref<2x4x256xf32, #tpu.memory_space<vmem>>, %arg4: memref<2x1x256xf32, #tpu.memory_space<vmem>>, %arg5: memref<2x256xf32, #tpu.memory_space<vmem>>, %arg6: memref<2x256xf32, #tpu.memory_space<vmem>>) attributes {dimension_semantics = [#tpu.dimension_semantics<parallel>, #tpu.dimension_semantics<arbitrary>], iteration_bounds = array<i64: 1, 1>, scalar_prefetch = 0 : i64, scratch_operands = 2 : i64, tpu.core_type = #tpu.core_type<tc>, window_params = [{pipeline_mode = #tpu.pipeline_mode<synchronous>, transform_indices = @transform_0, window_bounds = array<i64: 98, 256>}, {transform_indices = @transform_1, window_bounds = array<i64: 2, 4, 256>}, {transform_indices = @transform_2, window_bounds = array<i64: 2, 1, 256>}]} {
    %c0_i32 = arith.constant 0 : i32
    %0 = arith.cmpi eq, %arg1, %c0_i32 : i32
    %1 = arith.extui %0 : i1 to i32
    %c0_i32_0 = arith.constant 0 : i32
    %2 = arith.cmpi ne, %1, %c0_i32_0 : i32
    scf.if %2 {
      %cst_14 = arith.constant 0.000000e+00 : f32
      %15 = vector.broadcast %cst_14 : f32 to vector<2x256xf32>
      %c0_15 = arith.constant 0 : index
      %c0_16 = arith.constant 0 : index
      %16 = vector.load %arg5[%c0_15, %c0_16] : memref<2x256xf32, #tpu.memory_space<vmem>>, vector<2x256xf32>
      tpu.vector_store %arg5[%c0_15, %c0_16], %15 {strides = array<i32>} : memref<2x256xf32, #tpu.memory_space<vmem>>, vector<2x256xf32>,
      %cst_17 = arith.constant 0xFF800000 : f32
      %17 = vector.broadcast %cst_17 : f32 to vector<2x256xf32>
      %c0_18 = arith.constant 0 : index
      %c0_19 = arith.constant 0 : index
      %18 = vector.load %arg6[%c0_18, %c0_19] : memref<2x256xf32, #tpu.memory_space<vmem>>, vector<2x256xf32>
      tpu.vector_store %arg6[%c0_18, %c0_19], %17 {strides = array<i32>} : memref<2x256xf32, #tpu.memory_space<vmem>>, vector<2x256xf32>,
    } else {
    }
    %c0 = arith.constant 0 : index
    %c0_1 = arith.constant 0 : index
    %c0_2 = arith.constant 0 : index
    %3 = vector.load %arg3[%c0, %c0_1, %c0_2] : memref<2x4x256xf32, #tpu.memory_space<vmem>>, vector<2x4x256xf32>
    %c0_3 = arith.constant 0 : index
    %c0_4 = arith.constant 0 : index
    %4 = vector.load %arg5[%c0_3, %c0_4] : memref<2x256xf32, #tpu.memory_space<vmem>>, vector<2x256xf32>
    %cst = arith.constant dense<0.000000e+00> : vector<2x256xf32>
    %5 = vector.multi_reduction <add>, %3, %cst [1] : vector<2x4x256xf32> to vector<2x256xf32>
    %6 = arith.addf %4, %5 : vector<2x256xf32>
    %c0_5 = arith.constant 0 : index
    %c0_6 = arith.constant 0 : index
    %7 = vector.load %arg5[%c0_5, %c0_6] : memref<2x256xf32, #tpu.memory_space<vmem>>, vector<2x256xf32>
    tpu.vector_store %arg5[%c0_5, %c0_6], %6 {strides = array<i32>} : memref<2x256xf32, #tpu.memory_space<vmem>>, vector<2x256xf32>,
    %c0_7 = arith.constant 0 : index
    %c0_8 = arith.constant 0 : index
    %8 = vector.load %arg6[%c0_7, %c0_8] : memref<2x256xf32, #tpu.memory_space<vmem>>, vector<2x256xf32>
    %cst_9 = arith.constant dense<0xFF800000> : vector<2x256xf32>
    %9 = vector.multi_reduction <maximumf>, %3, %cst_9 [1] : vector<2x4x256xf32> to vector<2x256xf32>
    %10 = arith.maximumf %8, %9 : vector<2x256xf32>
    %c0_10 = arith.constant 0 : index
    %c0_11 = arith.constant 0 : index
    %11 = vector.load %arg6[%c0_10, %c0_11] : memref<2x256xf32, #tpu.memory_space<vmem>>, vector<2x256xf32>
    tpu.vector_store %arg6[%c0_10, %c0_11], %10 {strides = array<i32>} : memref<2x256xf32, #tpu.memory_space<vmem>>, vector<2x256xf32>,
    %c0_i32_12 = arith.constant 0 : i32
    %12 = arith.cmpi eq, %arg1, %c0_i32_12 : i32
    %13 = arith.extui %12 : i1 to i32
    %c0_i32_13 = arith.constant 0 : i32
    %14 = arith.cmpi ne, %13, %c0_i32_13 : i32
    scf.if %14 {
      %c0_14 = arith.constant 0 : index
      %c0_15 = arith.constant 0 : index
      %15 = vector.load %arg5[%c0_14, %c0_15] : memref<2x256xf32, #tpu.memory_space<vmem>>, vector<2x256xf32>
      %cst_16 = arith.constant 2.500000e-01 : f32
      %16 = vector.broadcast %cst_16 : f32 to vector<2x256xf32>
      %17 = arith.mulf %15, %16 : vector<2x256xf32>
      %c0_17 = arith.constant 0 : index
      %c0_18 = arith.constant 0 : index
      %18 = vector.load %arg6[%c0_17, %c0_18] : memref<2x256xf32, #tpu.memory_space<vmem>>, vector<2x256xf32>
      %cst_19 = arith.constant 0.000000e+00 : f32
      %19 = vector.broadcast %cst_19 : f32 to vector<2x256xf32>
      %c48_i32 = arith.constant 48 : i32
      %20 = tpu.dynamic_rotate %17 by %c48_i32 dim 1 : vector<2x256xf32>, i32 -> vector<2x256xf32>
      %c48_i32_20 = arith.constant 48 : i32
      %21 = tpu.dynamic_rotate %18 by %c48_i32_20 dim 1 : vector<2x256xf32>, i32 -> vector<2x256xf32>
      %c3_i32 = arith.constant 3 : i32
      %22 = tpu.dynamic_rotate %20 by %c3_i32 dim 1 : vector<2x256xf32>, i32 -> vector<2x256xf32>
      %c3_i32_21 = arith.constant 3 : i32
      %23 = tpu.dynamic_rotate %21 by %c3_i32_21 dim 1 : vector<2x256xf32>, i32 -> vector<2x256xf32>
      %c0_22 = arith.constant 0 : index
      %c0_23 = arith.constant 0 : index
      %24 = vector.load %arg2[%c0_22, %c0_23] : memref<98x256xf32, #tpu.memory_space<vmem>>, vector<1x256xf32>
      %c49 = arith.constant 49 : index
      %c0_24 = arith.constant 0 : index
      %25 = vector.load %arg2[%c49, %c0_24] : memref<98x256xf32, #tpu.memory_space<vmem>>, vector<1x256xf32>
      %26 = vector.broadcast %24 : vector<1x256xf32> to vector<2x256xf32>
      %27 = arith.mulf %26, %22 : vector<2x256xf32>
      %28 = arith.addf %19, %27 : vector<2x256xf32>
      %29 = vector.broadcast %25 : vector<1x256xf32> to vector<2x256xf32>
      %30 = arith.mulf %29, %23 : vector<2x256xf32>
      %31 = arith.addf %28, %30 : vector<2x256xf32>
      %c2_i32 = arith.constant 2 : i32
      %32 = tpu.dynamic_rotate %20 by %c2_i32 dim 1 : vector<2x256xf32>, i32 -> vector<2x256xf32>
      %c2_i32_25 = arith.constant 2 : i32
      %33 = tpu.dynamic_rotate %21 by %c2_i32_25 dim 1 : vector<2x256xf32>, i32 -> vector<2x256xf32>
      %c1 = arith.constant 1 : index
      %c0_26 = arith.constant 0 : index
      %34 = vector.load %arg2[%c1, %c0_26] : memref<98x256xf32, #tpu.memory_space<vmem>>, vector<1x256xf32>
      %c50 = arith.constant 50 : index
      %c0_27 = arith.constant 0 : index
      %35 = vector.load %arg2[%c50, %c0_27] : memref<98x256xf32, #tpu.memory_space<vmem>>, vector<1x256xf32>
      %36 = vector.broadcast %34 : vector<1x256xf32> to vector<2x256xf32>
      %37 = arith.mulf %36, %32 : vector<2x256xf32>
      %38 = arith.addf %31, %37 : vector<2x256xf32>
      %39 = vector.broadcast %35 : vector<1x256xf32> to vector<2x256xf32>
      %40 = arith.mulf %39, %33 : vector<2x256xf32>
      %41 = arith.addf %38, %40 : vector<2x256xf32>
      %c1_i32 = arith.constant 1 : i32
      %42 = tpu.dynamic_rotate %20 by %c1_i32 dim 1 : vector<2x256xf32>, i32 -> vector<2x256xf32>
      %c1_i32_28 = arith.constant 1 : i32
      %43 = tpu.dynamic_rotate %21 by %c1_i32_28 dim 1 : vector<2x256xf32>, i32 -> vector<2x256xf32>
      %c2 = arith.constant 2 : index
      %c0_29 = arith.constant 0 : index
      %44 = vector.load %arg2[%c2, %c0_29] : memref<98x256xf32, #tpu.memory_space<vmem>>, vector<1x256xf32>
      %c51 = arith.constant 51 : index
      %c0_30 = arith.constant 0 : index
      %45 = vector.load %arg2[%c51, %c0_30] : memref<98x256xf32, #tpu.memory_space<vmem>>, vector<1x256xf32>
      %46 = vector.broadcast %44 : vector<1x256xf32> to vector<2x256xf32>
      %47 = arith.mulf %46, %42 : vector<2x256xf32>
      %48 = arith.addf %41, %47 : vector<2x256xf32>
      %49 = vector.broadcast %45 : vector<1x256xf32> to vector<2x256xf32>
      %50 = arith.mulf %49, %43 : vector<2x256xf32>
      %51 = arith.addf %48, %50 : vector<2x256xf32>
      %c3 = arith.constant 3 : index
      %c0_31 = arith.constant 0 : index
      %52 = vector.load %arg2[%c3, %c0_31] : memref<98x256xf32, #tpu.memory_space<vmem>>, vector<1x256xf32>
      %c52 = arith.constant 52 : index
      %c0_32 = arith.constant 0 : index
      %53 = vector.load %arg2[%c52, %c0_32] : memref<98x256xf32, #tpu.memory_space<vmem>>, vector<1x256xf32>
      %54 = vector.broadcast %52 : vector<1x256xf32> to vector<2x256xf32>
      %55 = arith.mulf %54, %20 : vector<2x256xf32>
      %56 = arith.addf %51, %55 : vector<2x256xf32>
      %57 = vector.broadcast %53 : vector<1x256xf32> to vector<2x256xf32>
      %58 = arith.mulf %57, %21 : vector<2x256xf32>
      %59 = arith.addf %56, %58 : vector<2x256xf32>
      %c255_i32 = arith.constant 255 : i32
      %60 = tpu.dynamic_rotate %20 by %c255_i32 dim 1 : vector<2x256xf32>, i32 -> vector<2x256xf32>
      %c255_i32_33 = arith.constant 255 : i32
      %61 = tpu.dynamic_rotate %21 by %c255_i32_33 dim 1 : vector<2x256xf32>, i32 -> vector<2x256xf32>
      %c4 = arith.constant 4 : index
      %c0_34 = arith.constant 0 : index
      %62 = vector.load %arg2[%c4, %c0_34] : memref<98x256xf32, #tpu.memory_space<vmem>>, vector<1x256xf32>
      %c53 = arith.constant 53 : index
      %c0_35 = arith.constant 0 : index
      %63 = vector.load %arg2[%c53, %c0_35] : memref<98x256xf32, #tpu.memory_space<vmem>>, vector<1x256xf32>
      %64 = vector.broadcast %62 : vector<1x256xf32> to vector<2x256xf32>
      %65 = arith.mulf %64, %60 : vector<2x256xf32>
      %66 = arith.addf %59, %65 : vector<2x256xf32>
      %67 = vector.broadcast %63 : vector<1x256xf32> to vector<2x256xf32>
      %68 = arith.mulf %67, %61 : vector<2x256xf32>
      %69 = arith.addf %66, %68 : vector<2x256xf32>
      %c254_i32 = arith.constant 254 : i32
      %70 = tpu.dynamic_rotate %20 by %c254_i32 dim 1 : vector<2x256xf32>, i32 -> vector<2x256xf32>
      %c254_i32_36 = arith.constant 254 : i32
      %71 = tpu.dynamic_rotate %21 by %c254_i32_36 dim 1 : vector<2x256xf32>, i32 -> vector<2x256xf32>
      %c5 = arith.constant 5 : index
      %c0_37 = arith.constant 0 : index
      %72 = vector.load %arg2[%c5, %c0_37] : memref<98x256xf32, #tpu.memory_space<vmem>>, vector<1x256xf32>
      %c54 = arith.constant 54 : index
      %c0_38 = arith.constant 0 : index
      %73 = vector.load %arg2[%c54, %c0_38] : memref<98x256xf32, #tpu.memory_space<vmem>>, vector<1x256xf32>
      %74 = vector.broadcast %72 : vector<1x256xf32> to vector<2x256xf32>
      %75 = arith.mulf %74, %70 : vector<2x256xf32>
      %76 = arith.addf %69, %75 : vector<2x256xf32>
      %77 = vector.broadcast %73 : vector<1x256xf32> to vector<2x256xf32>
      %78 = arith.mulf %77, %71 : vector<2x256xf32>
      %79 = arith.addf %76, %78 : vector<2x256xf32>
      %c253_i32 = arith.constant 253 : i32
      %80 = tpu.dynamic_rotate %20 by %c253_i32 dim 1 : vector<2x256xf32>, i32 -> vector<2x256xf32>
      %c253_i32_39 = arith.constant 253 : i32
      %81 = tpu.dynamic_rotate %21 by %c253_i32_39 dim 1 : vector<2x256xf32>, i32 -> vector<2x256xf32>
      %c6 = arith.constant 6 : index
      %c0_40 = arith.constant 0 : index
      %82 = vector.load %arg2[%c6, %c0_40] : memref<98x256xf32, #tpu.memory_space<vmem>>, vector<1x256xf32>
      %c55 = arith.constant 55 : index
      %c0_41 = arith.constant 0 : index
      %83 = vector.load %arg2[%c55, %c0_41] : memref<98x256xf32, #tpu.memory_space<vmem>>, vector<1x256xf32>
      %84 = vector.broadcast %82 : vector<1x256xf32> to vector<2x256xf32>
      %85 = arith.mulf %84, %80 : vector<2x256xf32>
      %86 = arith.addf %79, %85 : vector<2x256xf32>
      %87 = vector.broadcast %83 : vector<1x256xf32> to vector<2x256xf32>
      %88 = arith.mulf %87, %81 : vector<2x256xf32>
      %89 = arith.addf %86, %88 : vector<2x256xf32>
      %c32_i32 = arith.constant 32 : i32
      %90 = tpu.dynamic_rotate %17 by %c32_i32 dim 1 : vector<2x256xf32>, i32 -> vector<2x256xf32>
      %c32_i32_42 = arith.constant 32 : i32
      %91 = tpu.dynamic_rotate %18 by %c32_i32_42 dim 1 : vector<2x256xf32>, i32 -> vector<2x256xf32>
      %c3_i32_43 = arith.constant 3 : i32
      %92 = tpu.dynamic_rotate %90 by %c3_i32_43 dim 1 : vector<2x256xf32>, i32 -> vector<2x256xf32>
      %c3_i32_44 = arith.constant 3 : i32
      %93 = tpu.dynamic_rotate %91 by %c3_i32_44 dim 1 : vector<2x256xf32>, i32 -> vector<2x256xf32>
      %c7 = arith.constant 7 : index
      %c0_45 = arith.constant 0 : index
      %94 = vector.load %arg2[%c7, %c0_45] : memref<98x256xf32, #tpu.memory_space<vmem>>, vector<1x256xf32>
      %c56 = arith.constant 56 : index
      %c0_46 = arith.constant 0 : index
      %95 = vector.load %arg2[%c56, %c0_46] : memref<98x256xf32, #tpu.memory_space<vmem>>, vector<1x256xf32>
      %96 = vector.broadcast %94 : vector<1x256xf32> to vector<2x256xf32>
      %97 = arith.mulf %96, %92 : vector<2x256xf32>
      %98 = arith.addf %89, %97 : vector<2x256xf32>
      %99 = vector.broadcast %95 : vector<1x256xf32> to vector<2x256xf32>
      %100 = arith.mulf %99, %93 : vector<2x256xf32>
      %101 = arith.addf %98, %100 : vector<2x256xf32>
      %c2_i32_47 = arith.constant 2 : i32
      %102 = tpu.dynamic_rotate %90 by %c2_i32_47 dim 1 : vector<2x256xf32>, i32 -> vector<2x256xf32>
      %c2_i32_48 = arith.constant 2 : i32
      %103 = tpu.dynamic_rotate %91 by %c2_i32_48 dim 1 : vector<2x256xf32>, i32 -> vector<2x256xf32>
      %c8 = arith.constant 8 : index
      %c0_49 = arith.constant 0 : index
      %104 = vector.load %arg2[%c8, %c0_49] : memref<98x256xf32, #tpu.memory_space<vmem>>, vector<1x256xf32>
      %c57 = arith.constant 57 : index
      %c0_50 = arith.constant 0 : index
      %105 = vector.load %arg2[%c57, %c0_50] : memref<98x256xf32, #tpu.memory_space<vmem>>, vector<1x256xf32>
      %106 = vector.broadcast %104 : vector<1x256xf32> to vector<2x256xf32>
      %107 = arith.mulf %106, %102 : vector<2x256xf32>
      %108 = arith.addf %101, %107 : vector<2x256xf32>
      %109 = vector.broadcast %105 : vector<1x256xf32> to vector<2x256xf32>
      %110 = arith.mulf %109, %103 : vector<2x256xf32>
      %111 = arith.addf %108, %110 : vector<2x256xf32>
      %c1_i32_51 = arith.constant 1 : i32
      %112 = tpu.dynamic_rotate %90 by %c1_i32_51 dim 1 : vector<2x256xf32>, i32 -> vector<2x256xf32>
      %c1_i32_52 = arith.constant 1 : i32
      %113 = tpu.dynamic_rotate %91 by %c1_i32_52 dim 1 : vector<2x256xf32>, i32 -> vector<2x256xf32>
      %c9 = arith.constant 9 : index
      %c0_53 = arith.constant 0 : index
      %114 = vector.load %arg2[%c9, %c0_53] : memref<98x256xf32, #tpu.memory_space<vmem>>, vector<1x256xf32>
      %c58 = arith.constant 58 : index
      %c0_54 = arith.constant 0 : index
      %115 = vector.load %arg2[%c58, %c0_54] : memref<98x256xf32, #tpu.memory_space<vmem>>, vector<1x256xf32>
      %116 = vector.broadcast %114 : vector<1x256xf32> to vector<2x256xf32>
      %117 = arith.mulf %116, %112 : vector<2x256xf32>
      %118 = arith.addf %111, %117 : vector<2x256xf32>
      %119 = vector.broadcast %115 : vector<1x256xf32> to vector<2x256xf32>
      %120 = arith.mulf %119, %113 : vector<2x256xf32>
      %121 = arith.addf %118, %120 : vector<2x256xf32>
      %c10 = arith.constant 10 : index
      %c0_55 = arith.constant 0 : index
      %122 = vector.load %arg2[%c10, %c0_55] : memref<98x256xf32, #tpu.memory_space<vmem>>, vector<1x256xf32>
      %c59 = arith.constant 59 : index
      %c0_56 = arith.constant 0 : index
      %123 = vector.load %arg2[%c59, %c0_56] : memref<98x256xf32, #tpu.memory_space<vmem>>, vector<1x256xf32>
      %124 = vector.broadcast %122 : vector<1x256xf32> to vector<2x256xf32>
      %125 = arith.mulf %124, %90 : vector<2x256xf32>
      %126 = arith.addf %121, %125 : vector<2x256xf32>
      %127 = vector.broadcast %123 : vector<1x256xf32> to vector<2x256xf32>
      %128 = arith.mulf %127, %91 : vector<2x256xf32>
      %129 = arith.addf %126, %128 : vector<2x256xf32>
      %c255_i32_57 = arith.constant 255 : i32
      %130 = tpu.dynamic_rotate %90 by %c255_i32_57 dim 1 : vector<2x256xf32>, i32 -> vector<2x256xf32>
      %c255_i32_58 = arith.constant 255 : i32
      %131 = tpu.dynamic_rotate %91 by %c255_i32_58 dim 1 : vector<2x256xf32>, i32 -> vector<2x256xf32>
      %c11 = arith.constant 11 : index
      %c0_59 = arith.constant 0 : index
      %132 = vector.load %arg2[%c11, %c0_59] : memref<98x256xf32, #tpu.memory_space<vmem>>, vector<1x256xf32>
      %c60 = arith.constant 60 : index
      %c0_60 = arith.constant 0 : index
      %133 = vector.load %arg2[%c60, %c0_60] : memref<98x256xf32, #tpu.memory_space<vmem>>, vector<1x256xf32>
      %134 = vector.broadcast %132 : vector<1x256xf32> to vector<2x256xf32>
      %135 = arith.mulf %134, %130 : vector<2x256xf32>
      %136 = arith.addf %129, %135 : vector<2x256xf32>
      %137 = vector.broadcast %133 : vector<1x256xf32> to vector<2x256xf32>
      %138 = arith.mulf %137, %131 : vector<2x256xf32>
      %139 = arith.addf %136, %138 : vector<2x256xf32>
      %c254_i32_61 = arith.constant 254 : i32
      %140 = tpu.dynamic_rotate %90 by %c254_i32_61 dim 1 : vector<2x256xf32>, i32 -> vector<2x256xf32>
      %c254_i32_62 = arith.constant 254 : i32
      %141 = tpu.dynamic_rotate %91 by %c254_i32_62 dim 1 : vector<2x256xf32>, i32 -> vector<2x256xf32>
      %c12 = arith.constant 12 : index
      %c0_63 = arith.constant 0 : index
      %142 = vector.load %arg2[%c12, %c0_63] : memref<98x256xf32, #tpu.memory_space<vmem>>, vector<1x256xf32>
      %c61 = arith.constant 61 : index
      %c0_64 = arith.constant 0 : index
      %143 = vector.load %arg2[%c61, %c0_64] : memref<98x256xf32, #tpu.memory_space<vmem>>, vector<1x256xf32>
      %144 = vector.broadcast %142 : vector<1x256xf32> to vector<2x256xf32>
      %145 = arith.mulf %144, %140 : vector<2x256xf32>
      %146 = arith.addf %139, %145 : vector<2x256xf32>
      %147 = vector.broadcast %143 : vector<1x256xf32> to vector<2x256xf32>
      %148 = arith.mulf %147, %141 : vector<2x256xf32>
      %149 = arith.addf %146, %148 : vector<2x256xf32>
      %c253_i32_65 = arith.constant 253 : i32
      %150 = tpu.dynamic_rotate %90 by %c253_i32_65 dim 1 : vector<2x256xf32>, i32 -> vector<2x256xf32>
      %c253_i32_66 = arith.constant 253 : i32
      %151 = tpu.dynamic_rotate %91 by %c253_i32_66 dim 1 : vector<2x256xf32>, i32 -> vector<2x256xf32>
      %c13 = arith.constant 13 : index
      %c0_67 = arith.constant 0 : index
      %152 = vector.load %arg2[%c13, %c0_67] : memref<98x256xf32, #tpu.memory_space<vmem>>, vector<1x256xf32>
      %c62 = arith.constant 62 : index
      %c0_68 = arith.constant 0 : index
      %153 = vector.load %arg2[%c62, %c0_68] : memref<98x256xf32, #tpu.memory_space<vmem>>, vector<1x256xf32>
      %154 = vector.broadcast %152 : vector<1x256xf32> to vector<2x256xf32>
      %155 = arith.mulf %154, %150 : vector<2x256xf32>
      %156 = arith.addf %149, %155 : vector<2x256xf32>
      %157 = vector.broadcast %153 : vector<1x256xf32> to vector<2x256xf32>
      %158 = arith.mulf %157, %151 : vector<2x256xf32>
      %159 = arith.addf %156, %158 : vector<2x256xf32>
      %c16_i32 = arith.constant 16 : i32
      %160 = tpu.dynamic_rotate %17 by %c16_i32 dim 1 : vector<2x256xf32>, i32 -> vector<2x256xf32>
      %c16_i32_69 = arith.constant 16 : i32
      %161 = tpu.dynamic_rotate %18 by %c16_i32_69 dim 1 : vector<2x256xf32>, i32 -> vector<2x256xf32>
      %c3_i32_70 = arith.constant 3 : i32
      %162 = tpu.dynamic_rotate %160 by %c3_i32_70 dim 1 : vector<2x256xf32>, i32 -> vector<2x256xf32>
      %c3_i32_71 = arith.constant 3 : i32
      %163 = tpu.dynamic_rotate %161 by %c3_i32_71 dim 1 : vector<2x256xf32>, i32 -> vector<2x256xf32>
      %c14 = arith.constant 14 : index
      %c0_72 = arith.constant 0 : index
      %164 = vector.load %arg2[%c14, %c0_72] : memref<98x256xf32, #tpu.memory_space<vmem>>, vector<1x256xf32>
      %c63 = arith.constant 63 : index
      %c0_73 = arith.constant 0 : index
      %165 = vector.load %arg2[%c63, %c0_73] : memref<98x256xf32, #tpu.memory_space<vmem>>, vector<1x256xf32>
      %166 = vector.broadcast %164 : vector<1x256xf32> to vector<2x256xf32>
      %167 = arith.mulf %166, %162 : vector<2x256xf32>
      %168 = arith.addf %159, %167 : vector<2x256xf32>
      %169 = vector.broadcast %165 : vector<1x256xf32> to vector<2x256xf32>
      %170 = arith.mulf %169, %163 : vector<2x256xf32>
      %171 = arith.addf %168, %170 : vector<2x256xf32>
      %c2_i32_74 = arith.constant 2 : i32
      %172 = tpu.dynamic_rotate %160 by %c2_i32_74 dim 1 : vector<2x256xf32>, i32 -> vector<2x256xf32>
      %c2_i32_75 = arith.constant 2 : i32
      %173 = tpu.dynamic_rotate %161 by %c2_i32_75 dim 1 : vector<2x256xf32>, i32 -> vector<2x256xf32>
      %c15 = arith.constant 15 : index
      %c0_76 = arith.constant 0 : index
      %174 = vector.load %arg2[%c15, %c0_76] : memref<98x256xf32, #tpu.memory_space<vmem>>, vector<1x256xf32>
      %c64 = arith.constant 64 : index
      %c0_77 = arith.constant 0 : index
      %175 = vector.load %arg2[%c64, %c0_77] : memref<98x256xf32, #tpu.memory_space<vmem>>, vector<1x256xf32>
      %176 = vector.broadcast %174 : vector<1x256xf32> to vector<2x256xf32>
      %177 = arith.mulf %176, %172 : vector<2x256xf32>
      %178 = arith.addf %171, %177 : vector<2x256xf32>
      %179 = vector.broadcast %175 : vector<1x256xf32> to vector<2x256xf32>
      %180 = arith.mulf %179, %173 : vector<2x256xf32>
      %181 = arith.addf %178, %180 : vector<2x256xf32>
      %c1_i32_78 = arith.constant 1 : i32
      %182 = tpu.dynamic_rotate %160 by %c1_i32_78 dim 1 : vector<2x256xf32>, i32 -> vector<2x256xf32>
      %c1_i32_79 = arith.constant 1 : i32
      %183 = tpu.dynamic_rotate %161 by %c1_i32_79 dim 1 : vector<2x256xf32>, i32 -> vector<2x256xf32>
      %c16 = arith.constant 16 : index
      %c0_80 = arith.constant 0 : index
      %184 = vector.load %arg2[%c16, %c0_80] : memref<98x256xf32, #tpu.memory_space<vmem>>, vector<1x256xf32>
      %c65 = arith.constant 65 : index
      %c0_81 = arith.constant 0 : index
      %185 = vector.load %arg2[%c65, %c0_81] : memref<98x256xf32, #tpu.memory_space<vmem>>, vector<1x256xf32>
      %186 = vector.broadcast %184 : vector<1x256xf32> to vector<2x256xf32>
      %187 = arith.mulf %186, %182 : vector<2x256xf32>
      %188 = arith.addf %181, %187 : vector<2x256xf32>
      %189 = vector.broadcast %185 : vector<1x256xf32> to vector<2x256xf32>
      %190 = arith.mulf %189, %183 : vector<2x256xf32>
      %191 = arith.addf %188, %190 : vector<2x256xf32>
      %c17 = arith.constant 17 : index
      %c0_82 = arith.constant 0 : index
      %192 = vector.load %arg2[%c17, %c0_82] : memref<98x256xf32, #tpu.memory_space<vmem>>, vector<1x256xf32>
      %c66 = arith.constant 66 : index
      %c0_83 = arith.constant 0 : index
      %193 = vector.load %arg2[%c66, %c0_83] : memref<98x256xf32, #tpu.memory_space<vmem>>, vector<1x256xf32>
      %194 = vector.broadcast %192 : vector<1x256xf32> to vector<2x256xf32>
      %195 = arith.mulf %194, %160 : vector<2x256xf32>
      %196 = arith.addf %191, %195 : vector<2x256xf32>
      %197 = vector.broadcast %193 : vector<1x256xf32> to vector<2x256xf32>
      %198 = arith.mulf %197, %161 : vector<2x256xf32>
      %199 = arith.addf %196, %198 : vector<2x256xf32>
      %c255_i32_84 = arith.constant 255 : i32
      %200 = tpu.dynamic_rotate %160 by %c255_i32_84 dim 1 : vector<2x256xf32>, i32 -> vector<2x256xf32>
      %c255_i32_85 = arith.constant 255 : i32
      %201 = tpu.dynamic_rotate %161 by %c255_i32_85 dim 1 : vector<2x256xf32>, i32 -> vector<2x256xf32>
      %c18 = arith.constant 18 : index
      %c0_86 = arith.constant 0 : index
      %202 = vector.load %arg2[%c18, %c0_86] : memref<98x256xf32, #tpu.memory_space<vmem>>, vector<1x256xf32>
      %c67 = arith.constant 67 : index
      %c0_87 = arith.constant 0 : index
      %203 = vector.load %arg2[%c67, %c0_87] : memref<98x256xf32, #tpu.memory_space<vmem>>, vector<1x256xf32>
      %204 = vector.broadcast %202 : vector<1x256xf32> to vector<2x256xf32>
      %205 = arith.mulf %204, %200 : vector<2x256xf32>
      %206 = arith.addf %199, %205 : vector<2x256xf32>
      %207 = vector.broadcast %203 : vector<1x256xf32> to vector<2x256xf32>
      %208 = arith.mulf %207, %201 : vector<2x256xf32>
      %209 = arith.addf %206, %208 : vector<2x256xf32>
      %c254_i32_88 = arith.constant 254 : i32
      %210 = tpu.dynamic_rotate %160 by %c254_i32_88 dim 1 : vector<2x256xf32>, i32 -> vector<2x256xf32>
      %c254_i32_89 = arith.constant 254 : i32
      %211 = tpu.dynamic_rotate %161 by %c254_i32_89 dim 1 : vector<2x256xf32>, i32 -> vector<2x256xf32>
      %c19 = arith.constant 19 : index
      %c0_90 = arith.constant 0 : index
      %212 = vector.load %arg2[%c19, %c0_90] : memref<98x256xf32, #tpu.memory_space<vmem>>, vector<1x256xf32>
      %c68 = arith.constant 68 : index
      %c0_91 = arith.constant 0 : index
      %213 = vector.load %arg2[%c68, %c0_91] : memref<98x256xf32, #tpu.memory_space<vmem>>, vector<1x256xf32>
      %214 = vector.broadcast %212 : vector<1x256xf32> to vector<2x256xf32>
      %215 = arith.mulf %214, %210 : vector<2x256xf32>
      %216 = arith.addf %209, %215 : vector<2x256xf32>
      %217 = vector.broadcast %213 : vector<1x256xf32> to vector<2x256xf32>
      %218 = arith.mulf %217, %211 : vector<2x256xf32>
      %219 = arith.addf %216, %218 : vector<2x256xf32>
      %c253_i32_92 = arith.constant 253 : i32
      %220 = tpu.dynamic_rotate %160 by %c253_i32_92 dim 1 : vector<2x256xf32>, i32 -> vector<2x256xf32>
      %c253_i32_93 = arith.constant 253 : i32
      %221 = tpu.dynamic_rotate %161 by %c253_i32_93 dim 1 : vector<2x256xf32>, i32 -> vector<2x256xf32>
      %c20 = arith.constant 20 : index
      %c0_94 = arith.constant 0 : index
      %222 = vector.load %arg2[%c20, %c0_94] : memref<98x256xf32, #tpu.memory_space<vmem>>, vector<1x256xf32>
      %c69 = arith.constant 69 : index
      %c0_95 = arith.constant 0 : index
      %223 = vector.load %arg2[%c69, %c0_95] : memref<98x256xf32, #tpu.memory_space<vmem>>, vector<1x256xf32>
      %224 = vector.broadcast %222 : vector<1x256xf32> to vector<2x256xf32>
      %225 = arith.mulf %224, %220 : vector<2x256xf32>
      %226 = arith.addf %219, %225 : vector<2x256xf32>
      %227 = vector.broadcast %223 : vector<1x256xf32> to vector<2x256xf32>
      %228 = arith.mulf %227, %221 : vector<2x256xf32>
      %229 = arith.addf %226, %228 : vector<2x256xf32>
      %c3_i32_96 = arith.constant 3 : i32
      %230 = tpu.dynamic_rotate %17 by %c3_i32_96 dim 1 : vector<2x256xf32>, i32 -> vector<2x256xf32>
      %c3_i32_97 = arith.constant 3 : i32
      %231 = tpu.dynamic_rotate %18 by %c3_i32_97 dim 1 : vector<2x256xf32>, i32 -> vector<2x256xf32>
      %c21 = arith.constant 21 : index
      %c0_98 = arith.constant 0 : index
      %232 = vector.load %arg2[%c21, %c0_98] : memref<98x256xf32, #tpu.memory_space<vmem>>, vector<1x256xf32>
      %c70 = arith.constant 70 : index
      %c0_99 = arith.constant 0 : index
      %233 = vector.load %arg2[%c70, %c0_99] : memref<98x256xf32, #tpu.memory_space<vmem>>, vector<1x256xf32>
      %234 = vector.broadcast %232 : vector<1x256xf32> to vector<2x256xf32>
      %235 = arith.mulf %234, %230 : vector<2x256xf32>
      %236 = arith.addf %229, %235 : vector<2x256xf32>
      %237 = vector.broadcast %233 : vector<1x256xf32> to vector<2x256xf32>
      %238 = arith.mulf %237, %231 : vector<2x256xf32>
      %239 = arith.addf %236, %238 : vector<2x256xf32>
      %c2_i32_100 = arith.constant 2 : i32
      %240 = tpu.dynamic_rotate %17 by %c2_i32_100 dim 1 : vector<2x256xf32>, i32 -> vector<2x256xf32>
      %c2_i32_101 = arith.constant 2 : i32
      %241 = tpu.dynamic_rotate %18 by %c2_i32_101 dim 1 : vector<2x256xf32>, i32 -> vector<2x256xf32>
      %c22 = arith.constant 22 : index
      %c0_102 = arith.constant 0 : index
      %242 = vector.load %arg2[%c22, %c0_102] : memref<98x256xf32, #tpu.memory_space<vmem>>, vector<1x256xf32>
      %c71 = arith.constant 71 : index
      %c0_103 = arith.constant 0 : index
      %243 = vector.load %arg2[%c71, %c0_103] : memref<98x256xf32, #tpu.memory_space<vmem>>, vector<1x256xf32>
      %244 = vector.broadcast %242 : vector<1x256xf32> to vector<2x256xf32>
      %245 = arith.mulf %244, %240 : vector<2x256xf32>
      %246 = arith.addf %239, %245 : vector<2x256xf32>
      %247 = vector.broadcast %243 : vector<1x256xf32> to vector<2x256xf32>
      %248 = arith.mulf %247, %241 : vector<2x256xf32>
      %249 = arith.addf %246, %248 : vector<2x256xf32>
      %c1_i32_104 = arith.constant 1 : i32
      %250 = tpu.dynamic_rotate %17 by %c1_i32_104 dim 1 : vector<2x256xf32>, i32 -> vector<2x256xf32>
      %c1_i32_105 = arith.constant 1 : i32
      %251 = tpu.dynamic_rotate %18 by %c1_i32_105 dim 1 : vector<2x256xf32>, i32 -> vector<2x256xf32>
      %c23 = arith.constant 23 : index
      %c0_106 = arith.constant 0 : index
      %252 = vector.load %arg2[%c23, %c0_106] : memref<98x256xf32, #tpu.memory_space<vmem>>, vector<1x256xf32>
      %c72 = arith.constant 72 : index
      %c0_107 = arith.constant 0 : index
      %253 = vector.load %arg2[%c72, %c0_107] : memref<98x256xf32, #tpu.memory_space<vmem>>, vector<1x256xf32>
      %254 = vector.broadcast %252 : vector<1x256xf32> to vector<2x256xf32>
      %255 = arith.mulf %254, %250 : vector<2x256xf32>
      %256 = arith.addf %249, %255 : vector<2x256xf32>
      %257 = vector.broadcast %253 : vector<1x256xf32> to vector<2x256xf32>
      %258 = arith.mulf %257, %251 : vector<2x256xf32>
      %259 = arith.addf %256, %258 : vector<2x256xf32>
      %c24 = arith.constant 24 : index
      %c0_108 = arith.constant 0 : index
      %260 = vector.load %arg2[%c24, %c0_108] : memref<98x256xf32, #tpu.memory_space<vmem>>, vector<1x256xf32>
      %c73 = arith.constant 73 : index
      %c0_109 = arith.constant 0 : index
      %261 = vector.load %arg2[%c73, %c0_109] : memref<98x256xf32, #tpu.memory_space<vmem>>, vector<1x256xf32>
      %262 = vector.broadcast %260 : vector<1x256xf32> to vector<2x256xf32>
      %263 = arith.mulf %262, %17 : vector<2x256xf32>
      %264 = arith.addf %259, %263 : vector<2x256xf32>
      %265 = vector.broadcast %261 : vector<1x256xf32> to vector<2x256xf32>
      %266 = arith.mulf %265, %18 : vector<2x256xf32>
      %267 = arith.addf %264, %266 : vector<2x256xf32>
      %c255_i32_110 = arith.constant 255 : i32
      %268 = tpu.dynamic_rotate %17 by %c255_i32_110 dim 1 : vector<2x256xf32>, i32 -> vector<2x256xf32>
      %c255_i32_111 = arith.constant 255 : i32
      %269 = tpu.dynamic_rotate %18 by %c255_i32_111 dim 1 : vector<2x256xf32>, i32 -> vector<2x256xf32>
      %c25 = arith.constant 25 : index
      %c0_112 = arith.constant 0 : index
      %270 = vector.load %arg2[%c25, %c0_112] : memref<98x256xf32, #tpu.memory_space<vmem>>, vector<1x256xf32>
      %c74 = arith.constant 74 : index
      %c0_113 = arith.constant 0 : index
      %271 = vector.load %arg2[%c74, %c0_113] : memref<98x256xf32, #tpu.memory_space<vmem>>, vector<1x256xf32>
      %272 = vector.broadcast %270 : vector<1x256xf32> to vector<2x256xf32>
      %273 = arith.mulf %272, %268 : vector<2x256xf32>
      %274 = arith.addf %267, %273 : vector<2x256xf32>
      %275 = vector.broadcast %271 : vector<1x256xf32> to vector<2x256xf32>
      %276 = arith.mulf %275, %269 : vector<2x256xf32>
      %277 = arith.addf %274, %276 : vector<2x256xf32>
      %c254_i32_114 = arith.constant 254 : i32
      %278 = tpu.dynamic_rotate %17 by %c254_i32_114 dim 1 : vector<2x256xf32>, i32 -> vector<2x256xf32>
      %c254_i32_115 = arith.constant 254 : i32
      %279 = tpu.dynamic_rotate %18 by %c254_i32_115 dim 1 : vector<2x256xf32>, i32 -> vector<2x256xf32>
      %c26 = arith.constant 26 : index
      %c0_116 = arith.constant 0 : index
      %280 = vector.load %arg2[%c26, %c0_116] : memref<98x256xf32, #tpu.memory_space<vmem>>, vector<1x256xf32>
      %c75 = arith.constant 75 : index
      %c0_117 = arith.constant 0 : index
      %281 = vector.load %arg2[%c75, %c0_117] : memref<98x256xf32, #tpu.memory_space<vmem>>, vector<1x256xf32>
      %282 = vector.broadcast %280 : vector<1x256xf32> to vector<2x256xf32>
      %283 = arith.mulf %282, %278 : vector<2x256xf32>
      %284 = arith.addf %277, %283 : vector<2x256xf32>
      %285 = vector.broadcast %281 : vector<1x256xf32> to vector<2x256xf32>
      %286 = arith.mulf %285, %279 : vector<2x256xf32>
      %287 = arith.addf %284, %286 : vector<2x256xf32>
      %c253_i32_118 = arith.constant 253 : i32
      %288 = tpu.dynamic_rotate %17 by %c253_i32_118 dim 1 : vector<2x256xf32>, i32 -> vector<2x256xf32>
      %c253_i32_119 = arith.constant 253 : i32
      %289 = tpu.dynamic_rotate %18 by %c253_i32_119 dim 1 : vector<2x256xf32>, i32 -> vector<2x256xf32>
      %c27 = arith.constant 27 : index
      %c0_120 = arith.constant 0 : index
      %290 = vector.load %arg2[%c27, %c0_120] : memref<98x256xf32, #tpu.memory_space<vmem>>, vector<1x256xf32>
      %c76 = arith.constant 76 : index
      %c0_121 = arith.constant 0 : index
      %291 = vector.load %arg2[%c76, %c0_121] : memref<98x256xf32, #tpu.memory_space<vmem>>, vector<1x256xf32>
      %292 = vector.broadcast %290 : vector<1x256xf32> to vector<2x256xf32>
      %293 = arith.mulf %292, %288 : vector<2x256xf32>
      %294 = arith.addf %287, %293 : vector<2x256xf32>
      %295 = vector.broadcast %291 : vector<1x256xf32> to vector<2x256xf32>
      %296 = arith.mulf %295, %289 : vector<2x256xf32>
      %297 = arith.addf %294, %296 : vector<2x256xf32>
      %c240_i32 = arith.constant 240 : i32
      %298 = tpu.dynamic_rotate %17 by %c240_i32 dim 1 : vector<2x256xf32>, i32 -> vector<2x256xf32>
      %c240_i32_122 = arith.constant 240 : i32
      %299 = tpu.dynamic_rotate %18 by %c240_i32_122 dim 1 : vector<2x256xf32>, i32 -> vector<2x256xf32>
      %c3_i32_123 = arith.constant 3 : i32
      %300 = tpu.dynamic_rotate %298 by %c3_i32_123 dim 1 : vector<2x256xf32>, i32 -> vector<2x256xf32>
      %c3_i32_124 = arith.constant 3 : i32
      %301 = tpu.dynamic_rotate %299 by %c3_i32_124 dim 1 : vector<2x256xf32>, i32 -> vector<2x256xf32>
      %c28 = arith.constant 28 : index
      %c0_125 = arith.constant 0 : index
      %302 = vector.load %arg2[%c28, %c0_125] : memref<98x256xf32, #tpu.memory_space<vmem>>, vector<1x256xf32>
      %c77 = arith.constant 77 : index
      %c0_126 = arith.constant 0 : index
      %303 = vector.load %arg2[%c77, %c0_126] : memref<98x256xf32, #tpu.memory_space<vmem>>, vector<1x256xf32>
      %304 = vector.broadcast %302 : vector<1x256xf32> to vector<2x256xf32>
      %305 = arith.mulf %304, %300 : vector<2x256xf32>
      %306 = arith.addf %297, %305 : vector<2x256xf32>
      %307 = vector.broadcast %303 : vector<1x256xf32> to vector<2x256xf32>
      %308 = arith.mulf %307, %301 : vector<2x256xf32>
      %309 = arith.addf %306, %308 : vector<2x256xf32>
      %c2_i32_127 = arith.constant 2 : i32
      %310 = tpu.dynamic_rotate %298 by %c2_i32_127 dim 1 : vector<2x256xf32>, i32 -> vector<2x256xf32>
      %c2_i32_128 = arith.constant 2 : i32
      %311 = tpu.dynamic_rotate %299 by %c2_i32_128 dim 1 : vector<2x256xf32>, i32 -> vector<2x256xf32>
      %c29 = arith.constant 29 : index
      %c0_129 = arith.constant 0 : index
      %312 = vector.load %arg2[%c29, %c0_129] : memref<98x256xf32, #tpu.memory_space<vmem>>, vector<1x256xf32>
      %c78 = arith.constant 78 : index
      %c0_130 = arith.constant 0 : index
      %313 = vector.load %arg2[%c78, %c0_130] : memref<98x256xf32, #tpu.memory_space<vmem>>, vector<1x256xf32>
      %314 = vector.broadcast %312 : vector<1x256xf32> to vector<2x256xf32>
      %315 = arith.mulf %314, %310 : vector<2x256xf32>
      %316 = arith.addf %309, %315 : vector<2x256xf32>
      %317 = vector.broadcast %313 : vector<1x256xf32> to vector<2x256xf32>
      %318 = arith.mulf %317, %311 : vector<2x256xf32>
      %319 = arith.addf %316, %318 : vector<2x256xf32>
      %c1_i32_131 = arith.constant 1 : i32
      %320 = tpu.dynamic_rotate %298 by %c1_i32_131 dim 1 : vector<2x256xf32>, i32 -> vector<2x256xf32>
      %c1_i32_132 = arith.constant 1 : i32
      %321 = tpu.dynamic_rotate %299 by %c1_i32_132 dim 1 : vector<2x256xf32>, i32 -> vector<2x256xf32>
      %c30 = arith.constant 30 : index
      %c0_133 = arith.constant 0 : index
      %322 = vector.load %arg2[%c30, %c0_133] : memref<98x256xf32, #tpu.memory_space<vmem>>, vector<1x256xf32>
      %c79 = arith.constant 79 : index
      %c0_134 = arith.constant 0 : index
      %323 = vector.load %arg2[%c79, %c0_134] : memref<98x256xf32, #tpu.memory_space<vmem>>, vector<1x256xf32>
      %324 = vector.broadcast %322 : vector<1x256xf32> to vector<2x256xf32>
      %325 = arith.mulf %324, %320 : vector<2x256xf32>
      %326 = arith.addf %319, %325 : vector<2x256xf32>
      %327 = vector.broadcast %323 : vector<1x256xf32> to vector<2x256xf32>
      %328 = arith.mulf %327, %321 : vector<2x256xf32>
      %329 = arith.addf %326, %328 : vector<2x256xf32>
      %c31 = arith.constant 31 : index
      %c0_135 = arith.constant 0 : index
      %330 = vector.load %arg2[%c31, %c0_135] : memref<98x256xf32, #tpu.memory_space<vmem>>, vector<1x256xf32>
      %c80 = arith.constant 80 : index
      %c0_136 = arith.constant 0 : index
      %331 = vector.load %arg2[%c80, %c0_136] : memref<98x256xf32, #tpu.memory_space<vmem>>, vector<1x256xf32>
      %332 = vector.broadcast %330 : vector<1x256xf32> to vector<2x256xf32>
      %333 = arith.mulf %332, %298 : vector<2x256xf32>
      %334 = arith.addf %329, %333 : vector<2x256xf32>
      %335 = vector.broadcast %331 : vector<1x256xf32> to vector<2x256xf32>
      %336 = arith.mulf %335, %299 : vector<2x256xf32>
      %337 = arith.addf %334, %336 : vector<2x256xf32>
      %c255_i32_137 = arith.constant 255 : i32
      %338 = tpu.dynamic_rotate %298 by %c255_i32_137 dim 1 : vector<2x256xf32>, i32 -> vector<2x256xf32>
      %c255_i32_138 = arith.constant 255 : i32
      %339 = tpu.dynamic_rotate %299 by %c255_i32_138 dim 1 : vector<2x256xf32>, i32 -> vector<2x256xf32>
      %c32 = arith.constant 32 : index
      %c0_139 = arith.constant 0 : index
      %340 = vector.load %arg2[%c32, %c0_139] : memref<98x256xf32, #tpu.memory_space<vmem>>, vector<1x256xf32>
      %c81 = arith.constant 81 : index
      %c0_140 = arith.constant 0 : index
      %341 = vector.load %arg2[%c81, %c0_140] : memref<98x256xf32, #tpu.memory_space<vmem>>, vector<1x256xf32>
      %342 = vector.broadcast %340 : vector<1x256xf32> to vector<2x256xf32>
      %343 = arith.mulf %342, %338 : vector<2x256xf32>
      %344 = arith.addf %337, %343 : vector<2x256xf32>
      %345 = vector.broadcast %341 : vector<1x256xf32> to vector<2x256xf32>
      %346 = arith.mulf %345, %339 : vector<2x256xf32>
      %347 = arith.addf %344, %346 : vector<2x256xf32>
      %c254_i32_141 = arith.constant 254 : i32
      %348 = tpu.dynamic_rotate %298 by %c254_i32_141 dim 1 : vector<2x256xf32>, i32 -> vector<2x256xf32>
      %c254_i32_142 = arith.constant 254 : i32
      %349 = tpu.dynamic_rotate %299 by %c254_i32_142 dim 1 : vector<2x256xf32>, i32 -> vector<2x256xf32>
      %c33 = arith.constant 33 : index
      %c0_143 = arith.constant 0 : index
      %350 = vector.load %arg2[%c33, %c0_143] : memref<98x256xf32, #tpu.memory_space<vmem>>, vector<1x256xf32>
      %c82 = arith.constant 82 : index
      %c0_144 = arith.constant 0 : index
      %351 = vector.load %arg2[%c82, %c0_144] : memref<98x256xf32, #tpu.memory_space<vmem>>, vector<1x256xf32>
      %352 = vector.broadcast %350 : vector<1x256xf32> to vector<2x256xf32>
      %353 = arith.mulf %352, %348 : vector<2x256xf32>
      %354 = arith.addf %347, %353 : vector<2x256xf32>
      %355 = vector.broadcast %351 : vector<1x256xf32> to vector<2x256xf32>
      %356 = arith.mulf %355, %349 : vector<2x256xf32>
      %357 = arith.addf %354, %356 : vector<2x256xf32>
      %c253_i32_145 = arith.constant 253 : i32
      %358 = tpu.dynamic_rotate %298 by %c253_i32_145 dim 1 : vector<2x256xf32>, i32 -> vector<2x256xf32>
      %c253_i32_146 = arith.constant 253 : i32
      %359 = tpu.dynamic_rotate %299 by %c253_i32_146 dim 1 : vector<2x256xf32>, i32 -> vector<2x256xf32>
      %c34 = arith.constant 34 : index
      %c0_147 = arith.constant 0 : index
      %360 = vector.load %arg2[%c34, %c0_147] : memref<98x256xf32, #tpu.memory_space<vmem>>, vector<1x256xf32>
      %c83 = arith.constant 83 : index
      %c0_148 = arith.constant 0 : index
      %361 = vector.load %arg2[%c83, %c0_148] : memref<98x256xf32, #tpu.memory_space<vmem>>, vector<1x256xf32>
      %362 = vector.broadcast %360 : vector<1x256xf32> to vector<2x256xf32>
      %363 = arith.mulf %362, %358 : vector<2x256xf32>
      %364 = arith.addf %357, %363 : vector<2x256xf32>
      %365 = vector.broadcast %361 : vector<1x256xf32> to vector<2x256xf32>
      %366 = arith.mulf %365, %359 : vector<2x256xf32>
      %367 = arith.addf %364, %366 : vector<2x256xf32>
      %c224_i32 = arith.constant 224 : i32
      %368 = tpu.dynamic_rotate %17 by %c224_i32 dim 1 : vector<2x256xf32>, i32 -> vector<2x256xf32>
      %c224_i32_149 = arith.constant 224 : i32
      %369 = tpu.dynamic_rotate %18 by %c224_i32_149 dim 1 : vector<2x256xf32>, i32 -> vector<2x256xf32>
      %c3_i32_150 = arith.constant 3 : i32
      %370 = tpu.dynamic_rotate %368 by %c3_i32_150 dim 1 : vector<2x256xf32>, i32 -> vector<2x256xf32>
      %c3_i32_151 = arith.constant 3 : i32
      %371 = tpu.dynamic_rotate %369 by %c3_i32_151 dim 1 : vector<2x256xf32>, i32 -> vector<2x256xf32>
      %c35 = arith.constant 35 : index
      %c0_152 = arith.constant 0 : index
      %372 = vector.load %arg2[%c35, %c0_152] : memref<98x256xf32, #tpu.memory_space<vmem>>, vector<1x256xf32>
      %c84 = arith.constant 84 : index
      %c0_153 = arith.constant 0 : index
      %373 = vector.load %arg2[%c84, %c0_153] : memref<98x256xf32, #tpu.memory_space<vmem>>, vector<1x256xf32>
      %374 = vector.broadcast %372 : vector<1x256xf32> to vector<2x256xf32>
      %375 = arith.mulf %374, %370 : vector<2x256xf32>
      %376 = arith.addf %367, %375 : vector<2x256xf32>
      %377 = vector.broadcast %373 : vector<1x256xf32> to vector<2x256xf32>
      %378 = arith.mulf %377, %371 : vector<2x256xf32>
      %379 = arith.addf %376, %378 : vector<2x256xf32>
      %c2_i32_154 = arith.constant 2 : i32
      %380 = tpu.dynamic_rotate %368 by %c2_i32_154 dim 1 : vector<2x256xf32>, i32 -> vector<2x256xf32>
      %c2_i32_155 = arith.constant 2 : i32
      %381 = tpu.dynamic_rotate %369 by %c2_i32_155 dim 1 : vector<2x256xf32>, i32 -> vector<2x256xf32>
      %c36 = arith.constant 36 : index
      %c0_156 = arith.constant 0 : index
      %382 = vector.load %arg2[%c36, %c0_156] : memref<98x256xf32, #tpu.memory_space<vmem>>, vector<1x256xf32>
      %c85 = arith.constant 85 : index
      %c0_157 = arith.constant 0 : index
      %383 = vector.load %arg2[%c85, %c0_157] : memref<98x256xf32, #tpu.memory_space<vmem>>, vector<1x256xf32>
      %384 = vector.broadcast %382 : vector<1x256xf32> to vector<2x256xf32>
      %385 = arith.mulf %384, %380 : vector<2x256xf32>
      %386 = arith.addf %379, %385 : vector<2x256xf32>
      %387 = vector.broadcast %383 : vector<1x256xf32> to vector<2x256xf32>
      %388 = arith.mulf %387, %381 : vector<2x256xf32>
      %389 = arith.addf %386, %388 : vector<2x256xf32>
      %c1_i32_158 = arith.constant 1 : i32
      %390 = tpu.dynamic_rotate %368 by %c1_i32_158 dim 1 : vector<2x256xf32>, i32 -> vector<2x256xf32>
      %c1_i32_159 = arith.constant 1 : i32
      %391 = tpu.dynamic_rotate %369 by %c1_i32_159 dim 1 : vector<2x256xf32>, i32 -> vector<2x256xf32>
      %c37 = arith.constant 37 : index
      %c0_160 = arith.constant 0 : index
      %392 = vector.load %arg2[%c37, %c0_160] : memref<98x256xf32, #tpu.memory_space<vmem>>, vector<1x256xf32>
      %c86 = arith.constant 86 : index
      %c0_161 = arith.constant 0 : index
      %393 = vector.load %arg2[%c86, %c0_161] : memref<98x256xf32, #tpu.memory_space<vmem>>, vector<1x256xf32>
      %394 = vector.broadcast %392 : vector<1x256xf32> to vector<2x256xf32>
      %395 = arith.mulf %394, %390 : vector<2x256xf32>
      %396 = arith.addf %389, %395 : vector<2x256xf32>
      %397 = vector.broadcast %393 : vector<1x256xf32> to vector<2x256xf32>
      %398 = arith.mulf %397, %391 : vector<2x256xf32>
      %399 = arith.addf %396, %398 : vector<2x256xf32>
      %c38 = arith.constant 38 : index
      %c0_162 = arith.constant 0 : index
      %400 = vector.load %arg2[%c38, %c0_162] : memref<98x256xf32, #tpu.memory_space<vmem>>, vector<1x256xf32>
      %c87 = arith.constant 87 : index
      %c0_163 = arith.constant 0 : index
      %401 = vector.load %arg2[%c87, %c0_163] : memref<98x256xf32, #tpu.memory_space<vmem>>, vector<1x256xf32>
      %402 = vector.broadcast %400 : vector<1x256xf32> to vector<2x256xf32>
      %403 = arith.mulf %402, %368 : vector<2x256xf32>
      %404 = arith.addf %399, %403 : vector<2x256xf32>
      %405 = vector.broadcast %401 : vector<1x256xf32> to vector<2x256xf32>
      %406 = arith.mulf %405, %369 : vector<2x256xf32>
      %407 = arith.addf %404, %406 : vector<2x256xf32>
      %c255_i32_164 = arith.constant 255 : i32
      %408 = tpu.dynamic_rotate %368 by %c255_i32_164 dim 1 : vector<2x256xf32>, i32 -> vector<2x256xf32>
      %c255_i32_165 = arith.constant 255 : i32
      %409 = tpu.dynamic_rotate %369 by %c255_i32_165 dim 1 : vector<2x256xf32>, i32 -> vector<2x256xf32>
      %c39 = arith.constant 39 : index
      %c0_166 = arith.constant 0 : index
      %410 = vector.load %arg2[%c39, %c0_166] : memref<98x256xf32, #tpu.memory_space<vmem>>, vector<1x256xf32>
      %c88 = arith.constant 88 : index
      %c0_167 = arith.constant 0 : index
      %411 = vector.load %arg2[%c88, %c0_167] : memref<98x256xf32, #tpu.memory_space<vmem>>, vector<1x256xf32>
      %412 = vector.broadcast %410 : vector<1x256xf32> to vector<2x256xf32>
      %413 = arith.mulf %412, %408 : vector<2x256xf32>
      %414 = arith.addf %407, %413 : vector<2x256xf32>
      %415 = vector.broadcast %411 : vector<1x256xf32> to vector<2x256xf32>
      %416 = arith.mulf %415, %409 : vector<2x256xf32>
      %417 = arith.addf %414, %416 : vector<2x256xf32>
      %c254_i32_168 = arith.constant 254 : i32
      %418 = tpu.dynamic_rotate %368 by %c254_i32_168 dim 1 : vector<2x256xf32>, i32 -> vector<2x256xf32>
      %c254_i32_169 = arith.constant 254 : i32
      %419 = tpu.dynamic_rotate %369 by %c254_i32_169 dim 1 : vector<2x256xf32>, i32 -> vector<2x256xf32>
      %c40 = arith.constant 40 : index
      %c0_170 = arith.constant 0 : index
      %420 = vector.load %arg2[%c40, %c0_170] : memref<98x256xf32, #tpu.memory_space<vmem>>, vector<1x256xf32>
      %c89 = arith.constant 89 : index
      %c0_171 = arith.constant 0 : index
      %421 = vector.load %arg2[%c89, %c0_171] : memref<98x256xf32, #tpu.memory_space<vmem>>, vector<1x256xf32>
      %422 = vector.broadcast %420 : vector<1x256xf32> to vector<2x256xf32>
      %423 = arith.mulf %422, %418 : vector<2x256xf32>
      %424 = arith.addf %417, %423 : vector<2x256xf32>
      %425 = vector.broadcast %421 : vector<1x256xf32> to vector<2x256xf32>
      %426 = arith.mulf %425, %419 : vector<2x256xf32>
      %427 = arith.addf %424, %426 : vector<2x256xf32>
      %c253_i32_172 = arith.constant 253 : i32
      %428 = tpu.dynamic_rotate %368 by %c253_i32_172 dim 1 : vector<2x256xf32>, i32 -> vector<2x256xf32>
      %c253_i32_173 = arith.constant 253 : i32
      %429 = tpu.dynamic_rotate %369 by %c253_i32_173 dim 1 : vector<2x256xf32>, i32 -> vector<2x256xf32>
      %c41 = arith.constant 41 : index
      %c0_174 = arith.constant 0 : index
      %430 = vector.load %arg2[%c41, %c0_174] : memref<98x256xf32, #tpu.memory_space<vmem>>, vector<1x256xf32>
      %c90 = arith.constant 90 : index
      %c0_175 = arith.constant 0 : index
      %431 = vector.load %arg2[%c90, %c0_175] : memref<98x256xf32, #tpu.memory_space<vmem>>, vector<1x256xf32>
      %432 = vector.broadcast %430 : vector<1x256xf32> to vector<2x256xf32>
      %433 = arith.mulf %432, %428 : vector<2x256xf32>
      %434 = arith.addf %427, %433 : vector<2x256xf32>
      %435 = vector.broadcast %431 : vector<1x256xf32> to vector<2x256xf32>
      %436 = arith.mulf %435, %429 : vector<2x256xf32>
      %437 = arith.addf %434, %436 : vector<2x256xf32>
      %c208_i32 = arith.constant 208 : i32
      %438 = tpu.dynamic_rotate %17 by %c208_i32 dim 1 : vector<2x256xf32>, i32 -> vector<2x256xf32>
      %c208_i32_176 = arith.constant 208 : i32
      %439 = tpu.dynamic_rotate %18 by %c208_i32_176 dim 1 : vector<2x256xf32>, i32 -> vector<2x256xf32>
      %c3_i32_177 = arith.constant 3 : i32
      %440 = tpu.dynamic_rotate %438 by %c3_i32_177 dim 1 : vector<2x256xf32>, i32 -> vector<2x256xf32>
      %c3_i32_178 = arith.constant 3 : i32
      %441 = tpu.dynamic_rotate %439 by %c3_i32_178 dim 1 : vector<2x256xf32>, i32 -> vector<2x256xf32>
      %c42 = arith.constant 42 : index
      %c0_179 = arith.constant 0 : index
      %442 = vector.load %arg2[%c42, %c0_179] : memref<98x256xf32, #tpu.memory_space<vmem>>, vector<1x256xf32>
      %c91 = arith.constant 91 : index
      %c0_180 = arith.constant 0 : index
      %443 = vector.load %arg2[%c91, %c0_180] : memref<98x256xf32, #tpu.memory_space<vmem>>, vector<1x256xf32>
      %444 = vector.broadcast %442 : vector<1x256xf32> to vector<2x256xf32>
      %445 = arith.mulf %444, %440 : vector<2x256xf32>
      %446 = arith.addf %437, %445 : vector<2x256xf32>
      %447 = vector.broadcast %443 : vector<1x256xf32> to vector<2x256xf32>
      %448 = arith.mulf %447, %441 : vector<2x256xf32>
      %449 = arith.addf %446, %448 : vector<2x256xf32>
      %c2_i32_181 = arith.constant 2 : i32
      %450 = tpu.dynamic_rotate %438 by %c2_i32_181 dim 1 : vector<2x256xf32>, i32 -> vector<2x256xf32>
      %c2_i32_182 = arith.constant 2 : i32
      %451 = tpu.dynamic_rotate %439 by %c2_i32_182 dim 1 : vector<2x256xf32>, i32 -> vector<2x256xf32>
      %c43 = arith.constant 43 : index
      %c0_183 = arith.constant 0 : index
      %452 = vector.load %arg2[%c43, %c0_183] : memref<98x256xf32, #tpu.memory_space<vmem>>, vector<1x256xf32>
      %c92 = arith.constant 92 : index
      %c0_184 = arith.constant 0 : index
      %453 = vector.load %arg2[%c92, %c0_184] : memref<98x256xf32, #tpu.memory_space<vmem>>, vector<1x256xf32>
      %454 = vector.broadcast %452 : vector<1x256xf32> to vector<2x256xf32>
      %455 = arith.mulf %454, %450 : vector<2x256xf32>
      %456 = arith.addf %449, %455 : vector<2x256xf32>
      %457 = vector.broadcast %453 : vector<1x256xf32> to vector<2x256xf32>
      %458 = arith.mulf %457, %451 : vector<2x256xf32>
      %459 = arith.addf %456, %458 : vector<2x256xf32>
      %c1_i32_185 = arith.constant 1 : i32
      %460 = tpu.dynamic_rotate %438 by %c1_i32_185 dim 1 : vector<2x256xf32>, i32 -> vector<2x256xf32>
      %c1_i32_186 = arith.constant 1 : i32
      %461 = tpu.dynamic_rotate %439 by %c1_i32_186 dim 1 : vector<2x256xf32>, i32 -> vector<2x256xf32>
      %c44 = arith.constant 44 : index
      %c0_187 = arith.constant 0 : index
      %462 = vector.load %arg2[%c44, %c0_187] : memref<98x256xf32, #tpu.memory_space<vmem>>, vector<1x256xf32>
      %c93 = arith.constant 93 : index
      %c0_188 = arith.constant 0 : index
      %463 = vector.load %arg2[%c93, %c0_188] : memref<98x256xf32, #tpu.memory_space<vmem>>, vector<1x256xf32>
      %464 = vector.broadcast %462 : vector<1x256xf32> to vector<2x256xf32>
      %465 = arith.mulf %464, %460 : vector<2x256xf32>
      %466 = arith.addf %459, %465 : vector<2x256xf32>
      %467 = vector.broadcast %463 : vector<1x256xf32> to vector<2x256xf32>
      %468 = arith.mulf %467, %461 : vector<2x256xf32>
      %469 = arith.addf %466, %468 : vector<2x256xf32>
      %c45 = arith.constant 45 : index
      %c0_189 = arith.constant 0 : index
      %470 = vector.load %arg2[%c45, %c0_189] : memref<98x256xf32, #tpu.memory_space<vmem>>, vector<1x256xf32>
      %c94 = arith.constant 94 : index
      %c0_190 = arith.constant 0 : index
      %471 = vector.load %arg2[%c94, %c0_190] : memref<98x256xf32, #tpu.memory_space<vmem>>, vector<1x256xf32>
      %472 = vector.broadcast %470 : vector<1x256xf32> to vector<2x256xf32>
      %473 = arith.mulf %472, %438 : vector<2x256xf32>
      %474 = arith.addf %469, %473 : vector<2x256xf32>
      %475 = vector.broadcast %471 : vector<1x256xf32> to vector<2x256xf32>
      %476 = arith.mulf %475, %439 : vector<2x256xf32>
      %477 = arith.addf %474, %476 : vector<2x256xf32>
      %c255_i32_191 = arith.constant 255 : i32
      %478 = tpu.dynamic_rotate %438 by %c255_i32_191 dim 1 : vector<2x256xf32>, i32 -> vector<2x256xf32>
      %c255_i32_192 = arith.constant 255 : i32
      %479 = tpu.dynamic_rotate %439 by %c255_i32_192 dim 1 : vector<2x256xf32>, i32 -> vector<2x256xf32>
      %c46 = arith.constant 46 : index
      %c0_193 = arith.constant 0 : index
      %480 = vector.load %arg2[%c46, %c0_193] : memref<98x256xf32, #tpu.memory_space<vmem>>, vector<1x256xf32>
      %c95 = arith.constant 95 : index
      %c0_194 = arith.constant 0 : index
      %481 = vector.load %arg2[%c95, %c0_194] : memref<98x256xf32, #tpu.memory_space<vmem>>, vector<1x256xf32>
      %482 = vector.broadcast %480 : vector<1x256xf32> to vector<2x256xf32>
      %483 = arith.mulf %482, %478 : vector<2x256xf32>
      %484 = arith.addf %477, %483 : vector<2x256xf32>
      %485 = vector.broadcast %481 : vector<1x256xf32> to vector<2x256xf32>
      %486 = arith.mulf %485, %479 : vector<2x256xf32>
      %487 = arith.addf %484, %486 : vector<2x256xf32>
      %c254_i32_195 = arith.constant 254 : i32
      %488 = tpu.dynamic_rotate %438 by %c254_i32_195 dim 1 : vector<2x256xf32>, i32 -> vector<2x256xf32>
      %c254_i32_196 = arith.constant 254 : i32
      %489 = tpu.dynamic_rotate %439 by %c254_i32_196 dim 1 : vector<2x256xf32>, i32 -> vector<2x256xf32>
      %c47 = arith.constant 47 : index
      %c0_197 = arith.constant 0 : index
      %490 = vector.load %arg2[%c47, %c0_197] : memref<98x256xf32, #tpu.memory_space<vmem>>, vector<1x256xf32>
      %c96 = arith.constant 96 : index
      %c0_198 = arith.constant 0 : index
      %491 = vector.load %arg2[%c96, %c0_198] : memref<98x256xf32, #tpu.memory_space<vmem>>, vector<1x256xf32>
      %492 = vector.broadcast %490 : vector<1x256xf32> to vector<2x256xf32>
      %493 = arith.mulf %492, %488 : vector<2x256xf32>
      %494 = arith.addf %487, %493 : vector<2x256xf32>
      %495 = vector.broadcast %491 : vector<1x256xf32> to vector<2x256xf32>
      %496 = arith.mulf %495, %489 : vector<2x256xf32>
      %497 = arith.addf %494, %496 : vector<2x256xf32>
      %c253_i32_199 = arith.constant 253 : i32
      %498 = tpu.dynamic_rotate %438 by %c253_i32_199 dim 1 : vector<2x256xf32>, i32 -> vector<2x256xf32>
      %c253_i32_200 = arith.constant 253 : i32
      %499 = tpu.dynamic_rotate %439 by %c253_i32_200 dim 1 : vector<2x256xf32>, i32 -> vector<2x256xf32>
      %c48 = arith.constant 48 : index
      %c0_201 = arith.constant 0 : index
      %500 = vector.load %arg2[%c48, %c0_201] : memref<98x256xf32, #tpu.memory_space<vmem>>, vector<1x256xf32>
      %c97 = arith.constant 97 : index
      %c0_202 = arith.constant 0 : index
      %501 = vector.load %arg2[%c97, %c0_202] : memref<98x256xf32, #tpu.memory_space<vmem>>, vector<1x256xf32>
      %502 = vector.broadcast %500 : vector<1x256xf32> to vector<2x256xf32>
      %503 = arith.mulf %502, %498 : vector<2x256xf32>
      %504 = arith.addf %497, %503 : vector<2x256xf32>
      %505 = vector.broadcast %501 : vector<1x256xf32> to vector<2x256xf32>
      %506 = arith.mulf %505, %499 : vector<2x256xf32>
      %507 = arith.addf %504, %506 : vector<2x256xf32>
      %508 = arith.negf %507 : vector<2x256xf32>
      %509 = math.exp %508 : vector<2x256xf32>
      %cst_203 = arith.constant 1.000000e+00 : f32
      %510 = vector.broadcast %cst_203 : f32 to vector<2x256xf32>
      %511 = arith.addf %510, %509 : vector<2x256xf32>
      %512 = arith.divf %510, %511 : vector<2x256xf32>
      %513 = vector.shape_cast %512 : vector<2x256xf32> to vector<2x1x256xf32>
      %c0_204 = arith.constant 0 : index
      %c0_205 = arith.constant 0 : index
      %c0_206 = arith.constant 0 : index
      %514 = vector.load %arg4[%c0_204, %c0_205, %c0_206] : memref<2x1x256xf32, #tpu.memory_space<vmem>>, vector<2x1x256xf32>
      tpu.vector_store %arg4[%c0_204, %c0_205, %c0_206], %513 {strides = array<i32>} : memref<2x1x256xf32, #tpu.memory_space<vmem>>, vector<2x1x256xf32>,
    } else {
    }
    return
  }
  func.func @transform_0(%arg0: i32, %arg1: i32) -> (i32, i32) {
    %c0_i32 = arith.constant 0 : i32
    %c0_i32_0 = arith.constant 0 : i32
    %c0_i32_1 = arith.constant 0 : i32
    return %c0_i32, %c0_i32_0 : i32, i32
  }
  func.func @transform_1(%arg0: i32, %arg1: i32) -> (i32, i32, i32) {
    %c0_i32 = arith.constant 0 : i32
    %c0_i32_0 = arith.constant 0 : i32
    return %arg0, %arg1, %c0_i32 : i32, i32, i32
  }
  func.func @transform_2(%arg0: i32, %arg1: i32) -> (i32, i32, i32) {
    %c0_i32 = arith.constant 0 : i32
    %c0_i32_0 = arith.constant 0 : i32
    %c0_i32_1 = arith.constant 0 : i32
    return %arg0, %c0_i32, %c0_i32_0 : i32, i32, i32
  }
}

</mosaic_0001>

<llo_original>
// kernel: tpu_custom_call.1
$region0: #{tpu_custom_call.1}
  #allocation0 [shape = 'u32[]', space=smem, size = 0x4, offset = 0x4, fixed_abs, tag = 'smem constant byte address 0x4 - core index']
  #allocation1 [shape = 'u32[72,128]{1,0:T(1,128)}', space=vmem, size = 0x9000, scoped, tag = 'internal scratch']
  #allocation2 [shape = 'f32[2,256]{1,0:T(2,128)}', space=vmem, size = 0x800, scoped, tag = 'scratch operand']
  #allocation3 [shape = 'f32[2,256]{1,0:T(2,128)}', space=vmem, size = 0x800, scoped, tag = 'scratch operand']
  %s0 = inlined_call_operand.hbm [shape: f32[98,256], index: 0, kind: input, shape index: {}]
  %s1 = inlined_call_operand.hbm [shape: f32[2,4,256], index: 1, kind: input, shape index: {}]
  %s2 = inlined_call_operand.hbm [shape: f32[2,1,256], index: 2, kind: output, shape index: {}]
  %s3 = sld [smem:[#allocation0]]
  $region34: #{tpu_custom_call.1} parent=0
    _
  %s5 = ssub.s32 1, %s3
  %s6 = scalar_select 0, %s5, %s3
  $region1: #{tpu_custom_call.1} parent=0
    #allocation4 [shape = 'u8[106496]{0}', space=vmem, size = 0x1a000, scoped, tag = 'input window, operand 0, single buffered']
    #allocation5 [shape = 's32[1]{0}', space=sflag, size = 0x4, scoped, tag = 'scoped memory for tpu_custom_call.1']
    #allocation6 [shape = 's32[1]{0}', space=sflag, size = 0x4, scoped, tag = 'scoped memory for tpu_custom_call.1']
    #allocation7 [shape = 'u8[8192]{0}', space=vmem, size = 0x2000, scoped, tag = 'input window, operand 1, single buffered']
    #allocation8 [shape = 's32[1]{0}', space=sflag, size = 0x4, scoped, tag = 'scoped memory for tpu_custom_call.1']
    #allocation9 [shape = 'u8[2048]{0}', space=vmem, size = 0x800, scoped, tag = 'output window, operand 0, single buffered']
    %7 = vsyncpa [#allocation5], 0
    %8 = vsyncpa [#allocation8], 0
    %9 = vsyncpa [#allocation6], 0
    // Predicated region
    $region2: #{tpu_custom_call.1} parent=1 // pred_check
      _
    $region3: #{tpu_custom_call.1} parent=1 // pred_check_branch
      %11 = sbr.rel (0) target = $region5
    $region4: #{tpu_custom_call.1} parent=1 // pred_region
      %13 = vsyncadd [#allocation5], 0
      %s14 = sshll.u32 %s0, 4
      %s15 = int_to_ptr.hbm [resolvable:$true] %s14
      %s16 = sshll.u32 [#allocation4], 4
      %s17 = int_to_ptr.vmem [resolvable:$true] %s16
      %22 = dma.hbm_to_vmem [thread:$0]  %s15, 3328, %s17, [#allocation5], 256, 256, 16
    $region5: #{tpu_custom_call.1} parent=1 // pred_fallthru
      _
    // Predicated region
    $region6: #{tpu_custom_call.1} parent=1 // pred_check
      _
    $region7: #{tpu_custom_call.1} parent=1 // pred_check_branch
      %24 = sbr.rel (0) target = $region9
    $region8: #{tpu_custom_call.1} parent=1 // pred_region
      %26 = vsyncadd [#allocation8], 0
      %s27 = sshll.u32 %s1, 4
      %s28 = int_to_ptr.hbm [resolvable:$true] %s27
      %s29 = sshll.u32 [#allocation7], 4
      %s30 = int_to_ptr.vmem [resolvable:$true] %s29
      %35 = dma.hbm_to_vmem [thread:$0]  %s28, 256, %s30, [#allocation8], 128, 128, 8
    $region9: #{tpu_custom_call.1} parent=1 // pred_fallthru
      _
    // Predicated region
    $region10: #{tpu_custom_call.1} parent=1 // pred_check
      _
    $region11: #{tpu_custom_call.1} parent=1 // pred_check_branch
      %37 = sbr.rel (0) target = $region13
    $region12: #{tpu_custom_call.1} parent=1 // pred_region
      %39 = dma.done [#allocation5], 3328
    $region13: #{tpu_custom_call.1} parent=1 // pred_fallthru
      _
    // Predicated region
    $region14: #{tpu_custom_call.1} parent=1 // pred_check
      _
    $region15: #{tpu_custom_call.1} parent=1 // pred_check_branch
      %41 = sbr.rel (0) target = $region17
    $region16: #{tpu_custom_call.1} parent=1 // pred_region
      %43 = dma.done [#allocation8], 256
    $region17: #{tpu_custom_call.1} parent=1 // pred_fallthru
      _
    %p44 = scmp.eq.s32.totalorder 0, 0
    // Predicated region
    $region18: #{tpu_custom_call.1} parent=1 // pred_check
      %p45 = pneg %p44
    $region19: #{tpu_custom_call.1} parent=1 // pred_check_branch
      %47 = sbr.rel (%p45) target = $region21
    $region20: #{tpu_custom_call.1} parent=1 // pred_region
      %48 = vst [vmem:[#allocation2] sm:$0xf] 0.0
      %49 = vst [vmem:[#allocation3] sm:$0xf] -inf
    $region21: #{tpu_custom_call.1} parent=1 // pred_fallthru
      _
    %v50 = vld [vmem:[#allocation7] sm:$0xff]
    %v51 = vld [vmem:[#allocation7 + $0x8] sm:$0xff]
    %v52 = vld [vmem:[#allocation2] sm:$0xf]
    %55 = vst [vmem:[#allocation1] ss:$2 sm:$0xff] %v50
    %v56 = vld.sshfl [vmem:[#allocation1] sm:$0xff pattern:$0x75316420]
    %v57 = vld.sshfl [vmem:[#allocation1 + $0x8] sm:$0xff pattern:$0x75316420]
    %s58 = scalar_lea.vmem [#allocation1], 16
    %59 = vst [vmem:[%s58] ss:$2 sm:$0xff] %v51
    %v60 = vld.sshfl [vmem:[#allocation1 + $0x10] sm:$0xff pattern:$0x75316420]
    %v61 = vld.sshfl [vmem:[#allocation1 + $0x18] sm:$0xff pattern:$0x75316420]
    %vm66 = vcmask 1043456
    %v67 = vsel %vm66, %v56, 0.0
    %v68 = vrot.slane %v67, 4
    %v69 = vadd.f32 %v67, %v68
    %v70 = vrot.slane %v69, 2
    %v71 = vadd.f32 %v69, %v70
    %v72 = vrot.slane %v71, 1
    %v73 = vadd.f32 %v71, %v72
    %v74 = vsel %vm66, %v57, 0.0
    %v75 = vrot.slane %v74, 4
    %v76 = vadd.f32 %v74, %v75
    %v77 = vrot.slane %v76, 2
    %v78 = vadd.f32 %v76, %v77
    %v79 = vrot.slane %v78, 1
    %v80 = vadd.f32 %v78, %v79
    %v81 = vsel %vm66, %v60, 0.0
    %v82 = vrot.slane %v81, 4
    %v83 = vadd.f32 %v81, %v82
    %v84 = vrot.slane %v83, 2
    %v85 = vadd.f32 %v83, %v84
    %v86 = vrot.slane %v85, 1
    %v87 = vadd.f32 %v85, %v86
    %v88 = vsel %vm66, %v61, 0.0
    %v89 = vrot.slane %v88, 4
    %v90 = vadd.f32 %v88, %v89
    %v91 = vrot.slane %v90, 2
    %v92 = vadd.f32 %v90, %v91
    %v93 = vrot.slane %v92, 1
    %v94 = vadd.f32 %v92, %v93
    %v99 = vrot.slane %v80, 6
    %v100 = vrot.slane %v94, 6
    %vm101 = vcmask 1041408
    %v102 = vsel %vm101, %v73, %v99
    %v103 = vsel %vm101, %v87, %v100
    %vm104 = vcmask 1044484
    %v105 = vsel %vm104, %v102, %v102
    %vm106 = vcmask 1046534
    %v107 = vsel %vm106, %v102, %v105
    %v108 = vrot.slane %v103, 7
    %vm109 = vcmask 1041409
    %v110 = vsel %vm109, %v108, %v107
    %vm111 = vcmask 1043459
    %v112 = vsel %vm111, %v108, %v110
    %vm113 = vcmask 1045509
    %v114 = vsel %vm113, %v108, %v112
    %vm115 = vcmask 1047559
    %v116 = vsel %vm115, %v108, %v114
    %v118 = vadd.f32 %v52, %v116
    %119 = vst [vmem:[#allocation2] sm:$0xf] %v118
    %v120 = vld [vmem:[#allocation3] sm:$0xf]
    %121 = vst [vmem:[#allocation1] ss:$2 sm:$0xff] %v50
    %v122 = vld.sshfl [vmem:[#allocation1] sm:$0xff pattern:$0x75316420]
    %v123 = vld.sshfl [vmem:[#allocation1 + $0x8] sm:$0xff pattern:$0x75316420]
    %s124 = scalar_lea.vmem [#allocation1], 16
    %125 = vst [vmem:[%s124] ss:$2 sm:$0xff] %v51
    %v126 = vld.sshfl [vmem:[#allocation1 + $0x10] sm:$0xff pattern:$0x75316420]
    %v127 = vld.sshfl [vmem:[#allocation1 + $0x18] sm:$0xff pattern:$0x75316420]
    %v132 = vsel %vm66, %v122, -inf
    %v133 = vrot.slane %v132, 4
    %v134 = vmax.f32 %v132, %v133
    %v135 = vrot.slane %v134, 2
    %v136 = vmax.f32 %v134, %v135
    %v137 = vrot.slane %v136, 1
    %v138 = vmax.f32 %v136, %v137
    %v139 = vsel %vm66, %v123, -inf
    %v140 = vrot.slane %v139, 4
    %v141 = vmax.f32 %v139, %v140
    %v142 = vrot.slane %v141, 2
    %v143 = vmax.f32 %v141, %v142
    %v144 = vrot.slane %v143, 1
    %v145 = vmax.f32 %v143, %v144
    %v146 = vsel %vm66, %v126, -inf
    %v147 = vrot.slane %v146, 4
    %v148 = vmax.f32 %v146, %v147
    %v149 = vrot.slane %v148, 2
    %v150 = vmax.f32 %v148, %v149
    %v151 = vrot.slane %v150, 1
    %v152 = vmax.f32 %v150, %v151
    %v153 = vsel %vm66, %v127, -inf
    %v154 = vrot.slane %v153, 4
    %v155 = vmax.f32 %v153, %v154
    %v156 = vrot.slane %v155, 2
    %v157 = vmax.f32 %v155, %v156
    %v158 = vrot.slane %v157, 1
    %v159 = vmax.f32 %v157, %v158
    %v164 = vrot.slane %v145, 6
    %v165 = vrot.slane %v159, 6
    %v166 = vsel %vm101, %v138, %v164
    %v167 = vsel %vm101, %v152, %v165
    %v168 = vsel %vm104, %v166, %v166
    %v169 = vsel %vm106, %v166, %v168
    %v170 = vrot.slane %v167, 7
    %v171 = vsel %vm109, %v170, %v169
    %v172 = vsel %vm111, %v170, %v171
    %v173 = vsel %vm113, %v170, %v172
    %v174 = vsel %vm115, %v170, %v173
    %v176 = vmax.f32 %v120, %v174
    %177 = vst [vmem:[#allocation3] sm:$0xf] %v176
    // Predicated region
    $region22: #{tpu_custom_call.1} parent=1 // pred_check
      %p178 = pneg %p44
    $region23: #{tpu_custom_call.1} parent=1 // pred_check_branch
      %180 = sbr.rel (%p178) target = $region25
    $region24: #{tpu_custom_call.1} parent=1 // pred_region
      %v181 = vld [vmem:[#allocation2] sm:$0xf]
      %v182 = vmul.f32 %v181, 0.25
      %v183 = vld [vmem:[#allocation3] sm:$0xf]
      %185 = vst [vmem:[#allocation1] ss:$4 sm:$0xff] %v182
      %v186 = vld.sshfl [vmem:[#allocation1] sm:$0xff pattern:$0x73625140]
      %v187 = vld.sshfl [vmem:[#allocation1 + $0x8] sm:$0xff pattern:$0x73625140]
      %190 = vrot.lane.b32.xlu0 %v186, 48
      %v191 = vpop.permute.xlu0 %190
      %192 = vrot.lane.b32.xlu0 %v187, 48
      %v193 = vpop.permute.xlu0 %192
      %v194 = vlaneseq
      %v195 = vand.u32 %v194, 127
      %vm196 = vcmp.lt.s32.totalorder %v195, 48
      %v197 = vsel %vm196, %v191, %v193
      %v198 = vsel %vm196, %v193, %v191
      %200 = vst [vmem:[#allocation1] ss:$4 sm:$0xff] %v183
      %v201 = vld.sshfl [vmem:[#allocation1] sm:$0xff pattern:$0x73625140]
      %v202 = vld.sshfl [vmem:[#allocation1 + $0x8] sm:$0xff pattern:$0x73625140]
      %205 = vrot.lane.b32.xlu0 %v201, 48
      %v206 = vpop.permute.xlu0 %205
      %207 = vrot.lane.b32.xlu0 %v202, 48
      %v208 = vpop.permute.xlu0 %207
      %v209 = vsel %vm196, %v206, %v208
      %v210 = vsel %vm196, %v208, %v206
      %211 = vrot.lane.b32.xlu0 %v198, 3
      %v212 = vpop.permute.xlu0 %211
      %213 = vrot.lane.b32.xlu0 %v197, 3
      %v214 = vpop.permute.xlu0 %213
      %vm215 = vcmp.lt.s32.totalorder %v195, 3
      %v216 = vsel %vm215, %v212, %v214
      %v217 = vsel %vm215, %v214, %v212
      %218 = vrot.lane.b32.xlu0 %v210, 3
      %v219 = vpop.permute.xlu0 %218
      %220 = vrot.lane.b32.xlu0 %v209, 3
      %v221 = vpop.permute.xlu0 %220
      %v222 = vsel %vm215, %v219, %v221
      %v223 = vsel %vm215, %v221, %v219
      %v224 = vld [vmem:[#allocation4] ss:$8 sm:$0x3]
      %s225 = scalar_lea.vmem [#allocation4], 97
      %v226 = vld [vmem:[%s225] ss:$8 sm:$0x3]
      %v228 = vperm.slane %v224, 0
      %v229 = vperm.slane %v224, 1
      %v232 = vmul.f32 %v228, %v217
      %v233 = vmul.f32 %v229, %v216
      %v234 = vadd.f32 %v232, 0.0
      %v235 = vadd.f32 %v233, 0.0
      %v237 = vperm.slane %v226, 0
      %v238 = vperm.slane %v226, 1
      %v241 = vmul.f32 %v237, %v223
      %v242 = vmul.f32 %v238, %v222
      %v243 = vadd.f32 %v234, %v241
      %v244 = vadd.f32 %v235, %v242
      %245 = vrot.lane.b32.xlu0 %v198, 2
      %v246 = vpop.permute.xlu0 %245
      %247 = vrot.lane.b32.xlu0 %v197, 2
      %v248 = vpop.permute.xlu0 %247
      %vm249 = vcmp.lt.s32.totalorder %v195, 2
      %v250 = vsel %vm249, %v246, %v248
      %v251 = vsel %vm249, %v248, %v246
      %252 = vrot.lane.b32.xlu0 %v210, 2
      %v253 = vpop.permute.xlu0 %252
      %254 = vrot.lane.b32.xlu0 %v209, 2
      %v255 = vpop.permute.xlu0 %254
      %v256 = vsel %vm249, %v253, %v255
      %v257 = vsel %vm249, %v255, %v253
      %s258 = scalar_lea.vmem [#allocation4], 1
      %v259 = vld [vmem:[%s258] ss:$8 sm:$0x3]
      %s260 = scalar_lea.vmem [#allocation4], 98
      %v261 = vld [vmem:[%s260] ss:$8 sm:$0x3]
      %v263 = vperm.slane %v259, 0
      %v264 = vperm.slane %v259, 1
      %v267 = vmul.f32 %v263, %v251
      %v268 = vmul.f32 %v264, %v250
      %v269 = vadd.f32 %v243, %v267
      %v270 = vadd.f32 %v244, %v268
      %v272 = vperm.slane %v261, 0
      %v273 = vperm.slane %v261, 1
      %v276 = vmul.f32 %v272, %v257
      %v277 = vmul.f32 %v273, %v256
      %v278 = vadd.f32 %v269, %v276
      %v279 = vadd.f32 %v270, %v277
      %280 = vrot.lane.b32.xlu0 %v198, 1
      %v281 = vpop.permute.xlu0 %280
      %282 = vrot.lane.b32.xlu0 %v197, 1
      %v283 = vpop.permute.xlu0 %282
      %vm284 = vcmp.lt.s32.totalorder %v195, 1
      %v285 = vsel %vm284, %v281, %v283
      %v286 = vsel %vm284, %v283, %v281
      %287 = vrot.lane.b32.xlu0 %v210, 1
      %v288 = vpop.permute.xlu0 %287
      %289 = vrot.lane.b32.xlu0 %v209, 1
      %v290 = vpop.permute.xlu0 %289
      %v291 = vsel %vm284, %v288, %v290
      %v292 = vsel %vm284, %v290, %v288
      %s293 = scalar_lea.vmem [#allocation4], 2
      %v294 = vld [vmem:[%s293] ss:$8 sm:$0x3]
      %s295 = scalar_lea.vmem [#allocation4], 99
      %v296 = vld [vmem:[%s295] ss:$8 sm:$0x3]
      %v298 = vperm.slane %v294, 0
      %v299 = vperm.slane %v294, 1
      %v302 = vmul.f32 %v298, %v286
      %v303 = vmul.f32 %v299, %v285
      %v304 = vadd.f32 %v278, %v302
      %v305 = vadd.f32 %v279, %v303
      %v307 = vperm.slane %v296, 0
      %v308 = vperm.slane %v296, 1
      %v311 = vmul.f32 %v307, %v292
      %v312 = vmul.f32 %v308, %v291
      %v313 = vadd.f32 %v304, %v311
      %v314 = vadd.f32 %v305, %v312
      %s315 = scalar_lea.vmem [#allocation4], 3
      %v316 = vld [vmem:[%s315] ss:$8 sm:$0x3]
      %s317 = scalar_lea.vmem [#allocation4], 100
      %v318 = vld [vmem:[%s317] ss:$8 sm:$0x3]
      %v320 = vperm.slane %v316, 0
      %v321 = vperm.slane %v316, 1
      %v324 = vmul.f32 %v320, %v198
      %v325 = vmul.f32 %v321, %v197
      %v326 = vadd.f32 %v313, %v324
      %v327 = vadd.f32 %v314, %v325
      %v329 = vperm.slane %v318, 0
      %v330 = vperm.slane %v318, 1
      %v333 = vmul.f32 %v329, %v210
      %v334 = vmul.f32 %v330, %v209
      %v335 = vadd.f32 %v326, %v333
      %v336 = vadd.f32 %v327, %v334
      %337 = vrot.lane.b32.xlu0 %v198, 127
      %v338 = vpop.permute.xlu0 %337
      %339 = vrot.lane.b32.xlu0 %v197, 127
      %v340 = vpop.permute.xlu0 %339
      %vm341 = vcmp.lt.s32.totalorder %v195, 127
      %v342 = vsel %vm341, %v338, %v340
      %v343 = vsel %vm341, %v340, %v338
      %344 = vrot.lane.b32.xlu0 %v210, 127
      %v345 = vpop.permute.xlu0 %344
      %346 = vrot.lane.b32.xlu0 %v209, 127
      %v347 = vpop.permute.xlu0 %346
      %v348 = vsel %vm341, %v345, %v347
      %v349 = vsel %vm341, %v347, %v345
      %s350 = scalar_lea.vmem [#allocation4], 4
      %v351 = vld [vmem:[%s350] ss:$8 sm:$0x3]
      %s352 = scalar_lea.vmem [#allocation4], 101
      %v353 = vld [vmem:[%s352] ss:$8 sm:$0x3]
      %v355 = vperm.slane %v351, 0
      %v356 = vperm.slane %v351, 1
      %v359 = vmul.f32 %v355, %v342
      %v360 = vmul.f32 %v356, %v343
      %v361 = vadd.f32 %v335, %v359
      %v362 = vadd.f32 %v336, %v360
      %v364 = vperm.slane %v353, 0
      %v365 = vperm.slane %v353, 1
      %v368 = vmul.f32 %v364, %v348
      %v369 = vmul.f32 %v365, %v349
      %v370 = vadd.f32 %v361, %v368
      %v371 = vadd.f32 %v362, %v369
      %372 = vrot.lane.b32.xlu0 %v198, 126
      %v373 = vpop.permute.xlu0 %372
      %374 = vrot.lane.b32.xlu0 %v197, 126
      %v375 = vpop.permute.xlu0 %374
      %vm376 = vcmp.lt.s32.totalorder %v195, 126
      %v377 = vsel %vm376, %v373, %v375
      %v378 = vsel %vm376, %v375, %v373
      %379 = vrot.lane.b32.xlu0 %v210, 126
      %v380 = vpop.permute.xlu0 %379
      %381 = vrot.lane.b32.xlu0 %v209, 126
      %v382 = vpop.permute.xlu0 %381
      %v383 = vsel %vm376, %v380, %v382
      %v384 = vsel %vm376, %v382, %v380
      %s385 = scalar_lea.vmem [#allocation4], 5
      %v386 = vld [vmem:[%s385] ss:$8 sm:$0x3]
      %s387 = scalar_lea.vmem [#allocation4], 102
      %v388 = vld [vmem:[%s387] ss:$8 sm:$0x3]
      %v390 = vperm.slane %v386, 0
      %v391 = vperm.slane %v386, 1
      %v394 = vmul.f32 %v390, %v377
      %v395 = vmul.f32 %v391, %v378
      %v396 = vadd.f32 %v370, %v394
      %v397 = vadd.f32 %v371, %v395
      %v399 = vperm.slane %v388, 0
      %v400 = vperm.slane %v388, 1
      %v403 = vmul.f32 %v399, %v383
      %v404 = vmul.f32 %v400, %v384
      %v405 = vadd.f32 %v396, %v403
      %v406 = vadd.f32 %v397, %v404
      %407 = vrot.lane.b32.xlu0 %v198, 125
      %v408 = vpop.permute.xlu0 %407
      %409 = vrot.lane.b32.xlu0 %v197, 125
      %v410 = vpop.permute.xlu0 %409
      %vm411 = vcmp.lt.s32.totalorder %v195, 125
      %v412 = vsel %vm411, %v408, %v410
      %v413 = vsel %vm411, %v410, %v408
      %414 = vrot.lane.b32.xlu0 %v210, 125
      %v415 = vpop.permute.xlu0 %414
      %416 = vrot.lane.b32.xlu0 %v209, 125
      %v417 = vpop.permute.xlu0 %416
      %v418 = vsel %vm411, %v415, %v417
      %v419 = vsel %vm411, %v417, %v415
      %s420 = scalar_lea.vmem [#allocation4], 6
      %v421 = vld [vmem:[%s420] ss:$8 sm:$0x3]
      %s422 = scalar_lea.vmem [#allocation4], 103
      %v423 = vld [vmem:[%s422] ss:$8 sm:$0x3]
      %v425 = vperm.slane %v421, 0
      %v426 = vperm.slane %v421, 1
      %v429 = vmul.f32 %v425, %v412
      %v430 = vmul.f32 %v426, %v413
      %v431 = vadd.f32 %v405, %v429
      %v432 = vadd.f32 %v406, %v430
      %v434 = vperm.slane %v423, 0
      %v435 = vperm.slane %v423, 1
      %v438 = vmul.f32 %v434, %v418
      %v439 = vmul.f32 %v435, %v419
      %v440 = vadd.f32 %v431, %v438
      %v441 = vadd.f32 %v432, %v439
      %442 = vst [vmem:[#allocation1] ss:$4 sm:$0xff] %v182
      %v443 = vld.sshfl [vmem:[#allocation1] sm:$0xff pattern:$0x73625140]
      %v444 = vld.sshfl [vmem:[#allocation1 + $0x8] sm:$0xff pattern:$0x73625140]
      %447 = vrot.lane.b32.xlu0 %v443, 32
      %v448 = vpop.permute.xlu0 %447
      %449 = vrot.lane.b32.xlu0 %v444, 32
      %v450 = vpop.permute.xlu0 %449
      %vm451 = vcmp.lt.s32.totalorder %v195, 32
      %v452 = vsel %vm451, %v448, %v450
      %v453 = vsel %vm451, %v450, %v448
      %454 = vst [vmem:[#allocation1] ss:$4 sm:$0xff] %v183
      %v455 = vld.sshfl [vmem:[#allocation1] sm:$0xff pattern:$0x73625140]
      %v456 = vld.sshfl [vmem:[#allocation1 + $0x8] sm:$0xff pattern:$0x73625140]
      %459 = vrot.lane.b32.xlu0 %v455, 32
      %v460 = vpop.permute.xlu0 %459
      %461 = vrot.lane.b32.xlu0 %v456, 32
      %v462 = vpop.permute.xlu0 %461
      %v463 = vsel %vm451, %v460, %v462
      %v464 = vsel %vm451, %v462, %v460
      %465 = vrot.lane.b32.xlu0 %v453, 3
      %v466 = vpop.permute.xlu0 %465
      %467 = vrot.lane.b32.xlu0 %v452, 3
      %v468 = vpop.permute.xlu0 %467
      %v469 = vsel %vm215, %v466, %v468
      %v470 = vsel %vm215, %v468, %v466
      %471 = vrot.lane.b32.xlu0 %v464, 3
      %v472 = vpop.permute.xlu0 %471
      %473 = vrot.lane.b32.xlu0 %v463, 3
      %v474 = vpop.permute.xlu0 %473
      %v475 = vsel %vm215, %v472, %v474
      %v476 = vsel %vm215, %v474, %v472
      %s477 = scalar_lea.vmem [#allocation4], 7
      %v478 = vld [vmem:[%s477] ss:$8 sm:$0x3]
      %s479 = scalar_lea.vmem [#allocation4], 112
      %v480 = vld [vmem:[%s479] ss:$8 sm:$0x3]
      %v482 = vperm.slane %v478, 0
      %v483 = vperm.slane %v478, 1
      %v486 = vmul.f32 %v482, %v470
      %v487 = vmul.f32 %v483, %v469
      %v488 = vadd.f32 %v440, %v486
      %v489 = vadd.f32 %v441, %v487
      %v491 = vperm.slane %v480, 0
      %v492 = vperm.slane %v480, 1
      %v495 = vmul.f32 %v491, %v476
      %v496 = vmul.f32 %v492, %v475
      %v497 = vadd.f32 %v488, %v495
      %v498 = vadd.f32 %v489, %v496
      %499 = vrot.lane.b32.xlu0 %v453, 2
      %v500 = vpop.permute.xlu0 %499
      %501 = vrot.lane.b32.xlu0 %v452, 2
      %v502 = vpop.permute.xlu0 %501
      %v503 = vsel %vm249, %v500, %v502
      %v504 = vsel %vm249, %v502, %v500
      %505 = vrot.lane.b32.xlu0 %v464, 2
      %v506 = vpop.permute.xlu0 %505
      %507 = vrot.lane.b32.xlu0 %v463, 2
      %v508 = vpop.permute.xlu0 %507
      %v509 = vsel %vm249, %v506, %v508
      %v510 = vsel %vm249, %v508, %v506
      %s511 = scalar_lea.vmem [#allocation4], 16
      %v512 = vld [vmem:[%s511] ss:$8 sm:$0x3]
      %s513 = scalar_lea.vmem [#allocation4], 113
      %v514 = vld [vmem:[%s513] ss:$8 sm:$0x3]
      %v516 = vperm.slane %v512, 0
      %v517 = vperm.slane %v512, 1
      %v520 = vmul.f32 %v516, %v504
      %v521 = vmul.f32 %v517, %v503
      %v522 = vadd.f32 %v497, %v520
      %v523 = vadd.f32 %v498, %v521
      %v525 = vperm.slane %v514, 0
      %v526 = vperm.slane %v514, 1
      %v529 = vmul.f32 %v525, %v510
      %v530 = vmul.f32 %v526, %v509
      %v531 = vadd.f32 %v522, %v529
      %v532 = vadd.f32 %v523, %v530
      %533 = vrot.lane.b32.xlu0 %v453, 1
      %v534 = vpop.permute.xlu0 %533
      %535 = vrot.lane.b32.xlu0 %v452, 1
      %v536 = vpop.permute.xlu0 %535
      %v537 = vsel %vm284, %v534, %v536
      %v538 = vsel %vm284, %v536, %v534
      %539 = vrot.lane.b32.xlu0 %v464, 1
      %v540 = vpop.permute.xlu0 %539
      %541 = vrot.lane.b32.xlu0 %v463, 1
      %v542 = vpop.permute.xlu0 %541
      %v543 = vsel %vm284, %v540, %v542
      %v544 = vsel %vm284, %v542, %v540
      %s545 = scalar_lea.vmem [#allocation4], 17
      %v546 = vld [vmem:[%s545] ss:$8 sm:$0x3]
      %s547 = scalar_lea.vmem [#allocation4], 114
      %v548 = vld [vmem:[%s547] ss:$8 sm:$0x3]
      %v550 = vperm.slane %v546, 0
      %v551 = vperm.slane %v546, 1
      %v554 = vmul.f32 %v550, %v538
      %v555 = vmul.f32 %v551, %v537
      %v556 = vadd.f32 %v531, %v554
      %v557 = vadd.f32 %v532, %v555
      %v559 = vperm.slane %v548, 0
      %v560 = vperm.slane %v548, 1
      %v563 = vmul.f32 %v559, %v544
      %v564 = vmul.f32 %v560, %v543
      %v565 = vadd.f32 %v556, %v563
      %v566 = vadd.f32 %v557, %v564
      %s567 = scalar_lea.vmem [#allocation4], 18
      %v568 = vld [vmem:[%s567] ss:$8 sm:$0x3]
      %s569 = scalar_lea.vmem [#allocation4], 115
      %v570 = vld [vmem:[%s569] ss:$8 sm:$0x3]
      %v572 = vperm.slane %v568, 0
      %v573 = vperm.slane %v568, 1
      %v576 = vmul.f32 %v572, %v453
      %v577 = vmul.f32 %v573, %v452
      %v578 = vadd.f32 %v565, %v576
      %v579 = vadd.f32 %v566, %v577
      %v581 = vperm.slane %v570, 0
      %v582 = vperm.slane %v570, 1
      %v585 = vmul.f32 %v581, %v464
      %v586 = vmul.f32 %v582, %v463
      %v587 = vadd.f32 %v578, %v585
      %v588 = vadd.f32 %v579, %v586
      %589 = vrot.lane.b32.xlu0 %v453, 127
      %v590 = vpop.permute.xlu0 %589
      %591 = vrot.lane.b32.xlu0 %v452, 127
      %v592 = vpop.permute.xlu0 %591
      %v593 = vsel %vm341, %v590, %v592
      %v594 = vsel %vm341, %v592, %v590
      %595 = vrot.lane.b32.xlu0 %v464, 127
      %v596 = vpop.permute.xlu0 %595
      %597 = vrot.lane.b32.xlu0 %v463, 127
      %v598 = vpop.permute.xlu0 %597
      %v599 = vsel %vm341, %v596, %v598
      %v600 = vsel %vm341, %v598, %v596
      %s601 = scalar_lea.vmem [#allocation4], 19
      %v602 = vld [vmem:[%s601] ss:$8 sm:$0x3]
      %s603 = scalar_lea.vmem [#allocation4], 116
      %v604 = vld [vmem:[%s603] ss:$8 sm:$0x3]
      %v606 = vperm.slane %v602, 0
      %v607 = vperm.slane %v602, 1
      %v610 = vmul.f32 %v606, %v593
      %v611 = vmul.f32 %v607, %v594
      %v612 = vadd.f32 %v587, %v610
      %v613 = vadd.f32 %v588, %v611
      %v615 = vperm.slane %v604, 0
      %v616 = vperm.slane %v604, 1
      %v619 = vmul.f32 %v615, %v599
      %v620 = vmul.f32 %v616, %v600
      %v621 = vadd.f32 %v612, %v619
      %v622 = vadd.f32 %v613, %v620
      %623 = vrot.lane.b32.xlu0 %v453, 126
      %v624 = vpop.permute.xlu0 %623
      %625 = vrot.lane.b32.xlu0 %v452, 126
      %v626 = vpop.permute.xlu0 %625
      %v627 = vsel %vm376, %v624, %v626
      %v628 = vsel %vm376, %v626, %v624
      %629 = vrot.lane.b32.xlu0 %v464, 126
      %v630 = vpop.permute.xlu0 %629
      %631 = vrot.lane.b32.xlu0 %v463, 126
      %v632 = vpop.permute.xlu0 %631
      %v633 = vsel %vm376, %v630, %v632
      %v634 = vsel %vm376, %v632, %v630
      %s635 = scalar_lea.vmem [#allocation4], 20
      %v636 = vld [vmem:[%s635] ss:$8 sm:$0x3]
      %s637 = scalar_lea.vmem [#allocation4], 117
      %v638 = vld [vmem:[%s637] ss:$8 sm:$0x3]
      %v640 = vperm.slane %v636, 0
      %v641 = vperm.slane %v636, 1
      %v644 = vmul.f32 %v640, %v627
      %v645 = vmul.f32 %v641, %v628
      %v646 = vadd.f32 %v621, %v644
      %v647 = vadd.f32 %v622, %v645
      %v649 = vperm.slane %v638, 0
      %v650 = vperm.slane %v638, 1
      %v653 = vmul.f32 %v649, %v633
      %v654 = vmul.f32 %v650, %v634
      %v655 = vadd.f32 %v646, %v653
      %v656 = vadd.f32 %v647, %v654
      %657 = vrot.lane.b32.xlu0 %v453, 125
      %v658 = vpop.permute.xlu0 %657
      %659 = vrot.lane.b32.xlu0 %v452, 125
      %v660 = vpop.permute.xlu0 %659
      %v661 = vsel %vm411, %v658, %v660
      %v662 = vsel %vm411, %v660, %v658
      %663 = vrot.lane.b32.xlu0 %v464, 125
      %v664 = vpop.permute.xlu0 %663
      %665 = vrot.lane.b32.xlu0 %v463, 125
      %v666 = vpop.permute.xlu0 %665
      %v667 = vsel %vm411, %v664, %v666
      %v668 = vsel %vm411, %v666, %v664
      %s669 = scalar_lea.vmem [#allocation4], 21
      %v670 = vld [vmem:[%s669] ss:$8 sm:$0x3]
      %s671 = scalar_lea.vmem [#allocation4], 118
      %v672 = vld [vmem:[%s671] ss:$8 sm:$0x3]
      %v674 = vperm.slane %v670, 0
      %v675 = vperm.slane %v670, 1
      %v678 = vmul.f32 %v674, %v661
      %v679 = vmul.f32 %v675, %v662
      %v680 = vadd.f32 %v655, %v678
      %v681 = vadd.f32 %v656, %v679
      %v683 = vperm.slane %v672, 0
      %v684 = vperm.slane %v672, 1
      %v687 = vmul.f32 %v683, %v667
      %v688 = vmul.f32 %v684, %v668
      %v689 = vadd.f32 %v680, %v687
      %v690 = vadd.f32 %v681, %v688
      %691 = vst [vmem:[#allocation1] ss:$4 sm:$0xff] %v182
      %v692 = vld.sshfl [vmem:[#allocation1] sm:$0xff pattern:$0x73625140]
      %v693 = vld.sshfl [vmem:[#allocation1 + $0x8] sm:$0xff pattern:$0x73625140]
      %696 = vrot.lane.b32.xlu0 %v692, 16
      %v697 = vpop.permute.xlu0 %696
      %698 = vrot.lane.b32.xlu0 %v693, 16
      %v699 = vpop.permute.xlu0 %698
      %vm700 = vcmp.lt.s32.totalorder %v195, 16
      %v701 = vsel %vm700, %v697, %v699
      %v702 = vsel %vm700, %v699, %v697
      %703 = vst [vmem:[#allocation1] ss:$4 sm:$0xff] %v183
      %v704 = vld.sshfl [vmem:[#allocation1] sm:$0xff pattern:$0x73625140]
      %v705 = vld.sshfl [vmem:[#allocation1 + $0x8] sm:$0xff pattern:$0x73625140]
      %708 = vrot.lane.b32.xlu0 %v704, 16
      %v709 = vpop.permute.xlu0 %708
      %710 = vrot.lane.b32.xlu0 %v705, 16
      %v711 = vpop.permute.xlu0 %710
      %v712 = vsel %vm700, %v709, %v711
      %v713 = vsel %vm700, %v711, %v709
      %714 = vrot.lane.b32.xlu0 %v702, 3
      %v715 = vpop.permute.xlu0 %714
      %716 = vrot.lane.b32.xlu0 %v701, 3
      %v717 = vpop.permute.xlu0 %716
      %v718 = vsel %vm215, %v715, %v717
      %v719 = vsel %vm215, %v717, %v715
      %720 = vrot.lane.b32.xlu0 %v713, 3
      %v721 = vpop.permute.xlu0 %720
      %722 = vrot.lane.b32.xlu0 %v712, 3
      %v723 = vpop.permute.xlu0 %722
      %v724 = vsel %vm215, %v721, %v723
      %v725 = vsel %vm215, %v723, %v721
      %s726 = scalar_lea.vmem [#allocation4], 22
      %v727 = vld [vmem:[%s726] ss:$8 sm:$0x3]
      %s728 = scalar_lea.vmem [#allocation4], 119
      %v729 = vld [vmem:[%s728] ss:$8 sm:$0x3]
      %v731 = vperm.slane %v727, 0
      %v732 = vperm.slane %v727, 1
      %v735 = vmul.f32 %v731, %v719
      %v736 = vmul.f32 %v732, %v718
      %v737 = vadd.f32 %v689, %v735
      %v738 = vadd.f32 %v690, %v736
      %v740 = vperm.slane %v729, 0
      %v741 = vperm.slane %v729, 1
      %v744 = vmul.f32 %v740, %v725
      %v745 = vmul.f32 %v741, %v724
      %v746 = vadd.f32 %v737, %v744
      %v747 = vadd.f32 %v738, %v745
      %748 = vrot.lane.b32.xlu0 %v702, 2
      %v749 = vpop.permute.xlu0 %748
      %750 = vrot.lane.b32.xlu0 %v701, 2
      %v751 = vpop.permute.xlu0 %750
      %v752 = vsel %vm249, %v749, %v751
      %v753 = vsel %vm249, %v751, %v749
      %754 = vrot.lane.b32.xlu0 %v713, 2
      %v755 = vpop.permute.xlu0 %754
      %756 = vrot.lane.b32.xlu0 %v712, 2
      %v757 = vpop.permute.xlu0 %756
      %v758 = vsel %vm249, %v755, %v757
      %v759 = vsel %vm249, %v757, %v755
      %s760 = scalar_lea.vmem [#allocation4], 23
      %v761 = vld [vmem:[%s760] ss:$8 sm:$0x3]
      %s762 = scalar_lea.vmem [#allocation4], 128
      %v763 = vld [vmem:[%s762] ss:$8 sm:$0x3]
      %v765 = vperm.slane %v761, 0
      %v766 = vperm.slane %v761, 1
      %v769 = vmul.f32 %v765, %v753
      %v770 = vmul.f32 %v766, %v752
      %v771 = vadd.f32 %v746, %v769
      %v772 = vadd.f32 %v747, %v770
      %v774 = vperm.slane %v763, 0
      %v775 = vperm.slane %v763, 1
      %v778 = vmul.f32 %v774, %v759
      %v779 = vmul.f32 %v775, %v758
      %v780 = vadd.f32 %v771, %v778
      %v781 = vadd.f32 %v772, %v779
      %782 = vrot.lane.b32.xlu0 %v702, 1
      %v783 = vpop.permute.xlu0 %782
      %784 = vrot.lane.b32.xlu0 %v701, 1
      %v785 = vpop.permute.xlu0 %784
      %v786 = vsel %vm284, %v783, %v785
      %v787 = vsel %vm284, %v785, %v783
      %788 = vrot.lane.b32.xlu0 %v713, 1
      %v789 = vpop.permute.xlu0 %788
      %790 = vrot.lane.b32.xlu0 %v712, 1
      %v791 = vpop.permute.xlu0 %790
      %v792 = vsel %vm284, %v789, %v791
      %v793 = vsel %vm284, %v791, %v789
      %s794 = scalar_lea.vmem [#allocation4], 32
      %v795 = vld [vmem:[%s794] ss:$8 sm:$0x3]
      %s796 = scalar_lea.vmem [#allocation4], 129
      %v797 = vld [vmem:[%s796] ss:$8 sm:$0x3]
      %v799 = vperm.slane %v795, 0
      %v800 = vperm.slane %v795, 1
      %v803 = vmul.f32 %v799, %v787
      %v804 = vmul.f32 %v800, %v786
      %v805 = vadd.f32 %v780, %v803
      %v806 = vadd.f32 %v781, %v804
      %v808 = vperm.slane %v797, 0
      %v809 = vperm.slane %v797, 1
      %v812 = vmul.f32 %v808, %v793
      %v813 = vmul.f32 %v809, %v792
      %v814 = vadd.f32 %v805, %v812
      %v815 = vadd.f32 %v806, %v813
      %s816 = scalar_lea.vmem [#allocation4], 33
      %v817 = vld [vmem:[%s816] ss:$8 sm:$0x3]
      %s818 = scalar_lea.vmem [#allocation4], 130
      %v819 = vld [vmem:[%s818] ss:$8 sm:$0x3]
      %v821 = vperm.slane %v817, 0
      %v822 = vperm.slane %v817, 1
      %v825 = vmul.f32 %v821, %v702
      %v826 = vmul.f32 %v822, %v701
      %v827 = vadd.f32 %v814, %v825
      %v828 = vadd.f32 %v815, %v826
      %v830 = vperm.slane %v819, 0
      %v831 = vperm.slane %v819, 1
      %v834 = vmul.f32 %v830, %v713
      %v835 = vmul.f32 %v831, %v712
      %v836 = vadd.f32 %v827, %v834
      %v837 = vadd.f32 %v828, %v835
      %838 = vrot.lane.b32.xlu0 %v702, 127
      %v839 = vpop.permute.xlu0 %838
      %840 = vrot.lane.b32.xlu0 %v701, 127
      %v841 = vpop.permute.xlu0 %840
      %v842 = vsel %vm341, %v839, %v841
      %v843 = vsel %vm341, %v841, %v839
      %844 = vrot.lane.b32.xlu0 %v713, 127
      %v845 = vpop.permute.xlu0 %844
      %846 = vrot.lane.b32.xlu0 %v712, 127
      %v847 = vpop.permute.xlu0 %846
      %v848 = vsel %vm341, %v845, %v847
      %v849 = vsel %vm341, %v847, %v845
      %s850 = scalar_lea.vmem [#allocation4], 34
      %v851 = vld [vmem:[%s850] ss:$8 sm:$0x3]
      %s852 = scalar_lea.vmem [#allocation4], 131
      %v853 = vld [vmem:[%s852] ss:$8 sm:$0x3]
      %v855 = vperm.slane %v851, 0
      %v856 = vperm.slane %v851, 1
      %v859 = vmul.f32 %v855, %v842
      %v860 = vmul.f32 %v856, %v843
      %v861 = vadd.f32 %v836, %v859
      %v862 = vadd.f32 %v837, %v860
      %v864 = vperm.slane %v853, 0
      %v865 = vperm.slane %v853, 1
      %v868 = vmul.f32 %v864, %v848
      %v869 = vmul.f32 %v865, %v849
      %v870 = vadd.f32 %v861, %v868
      %v871 = vadd.f32 %v862, %v869
      %872 = vrot.lane.b32.xlu0 %v702, 126
      %v873 = vpop.permute.xlu0 %872
      %874 = vrot.lane.b32.xlu0 %v701, 126
      %v875 = vpop.permute.xlu0 %874
      %v876 = vsel %vm376, %v873, %v875
      %v877 = vsel %vm376, %v875, %v873
      %878 = vrot.lane.b32.xlu0 %v713, 126
      %v879 = vpop.permute.xlu0 %878
      %880 = vrot.lane.b32.xlu0 %v712, 126
      %v881 = vpop.permute.xlu0 %880
      %v882 = vsel %vm376, %v879, %v881
      %v883 = vsel %vm376, %v881, %v879
      %s884 = scalar_lea.vmem [#allocation4], 35
      %v885 = vld [vmem:[%s884] ss:$8 sm:$0x3]
      %s886 = scalar_lea.vmem [#allocation4], 132
      %v887 = vld [vmem:[%s886] ss:$8 sm:$0x3]
      %v889 = vperm.slane %v885, 0
      %v890 = vperm.slane %v885, 1
      %v893 = vmul.f32 %v889, %v876
      %v894 = vmul.f32 %v890, %v877
      %v895 = vadd.f32 %v870, %v893
      %v896 = vadd.f32 %v871, %v894
      %v898 = vperm.slane %v887, 0
      %v899 = vperm.slane %v887, 1
      %v902 = vmul.f32 %v898, %v882
      %v903 = vmul.f32 %v899, %v883
      %v904 = vadd.f32 %v895, %v902
      %v905 = vadd.f32 %v896, %v903
      %906 = vrot.lane.b32.xlu0 %v702, 125
      %v907 = vpop.permute.xlu0 %906
      %908 = vrot.lane.b32.xlu0 %v701, 125
      %v909 = vpop.permute.xlu0 %908
      %v910 = vsel %vm411, %v907, %v909
      %v911 = vsel %vm411, %v909, %v907
      %912 = vrot.lane.b32.xlu0 %v713, 125
      %v913 = vpop.permute.xlu0 %912
      %914 = vrot.lane.b32.xlu0 %v712, 125
      %v915 = vpop.permute.xlu0 %914
      %v916 = vsel %vm411, %v913, %v915
      %v917 = vsel %vm411, %v915, %v913
      %s918 = scalar_lea.vmem [#allocation4], 36
      %v919 = vld [vmem:[%s918] ss:$8 sm:$0x3]
      %s920 = scalar_lea.vmem [#allocation4], 133
      %v921 = vld [vmem:[%s920] ss:$8 sm:$0x3]
      %v923 = vperm.slane %v919, 0
      %v924 = vperm.slane %v919, 1
      %v927 = vmul.f32 %v923, %v910
      %v928 = vmul.f32 %v924, %v911
      %v929 = vadd.f32 %v904, %v927
      %v930 = vadd.f32 %v905, %v928
      %v932 = vperm.slane %v921, 0
      %v933 = vperm.slane %v921, 1
      %v936 = vmul.f32 %v932, %v916
      %v937 = vmul.f32 %v933, %v917
      %v938 = vadd.f32 %v929, %v936
      %v939 = vadd.f32 %v930, %v937
      %940 = vst [vmem:[#allocation1] ss:$4 sm:$0xff] %v182
      %v941 = vld.sshfl [vmem:[#allocation1] sm:$0xff pattern:$0x73625140]
      %v942 = vld.sshfl [vmem:[#allocation1 + $0x8] sm:$0xff pattern:$0x73625140]
      %945 = vrot.lane.b32.xlu0 %v941, 3
      %v946 = vpop.permute.xlu0 %945
      %947 = vrot.lane.b32.xlu0 %v942, 3
      %v948 = vpop.permute.xlu0 %947
      %v949 = vsel %vm215, %v946, %v948
      %v950 = vsel %vm215, %v948, %v946
      %951 = vst [vmem:[#allocation1] ss:$4 sm:$0xff] %v183
      %v952 = vld.sshfl [vmem:[#allocation1] sm:$0xff pattern:$0x73625140]
      %v953 = vld.sshfl [vmem:[#allocation1 + $0x8] sm:$0xff pattern:$0x73625140]
      %956 = vrot.lane.b32.xlu0 %v952, 3
      %v957 = vpop.permute.xlu0 %956
      %958 = vrot.lane.b32.xlu0 %v953, 3
      %v959 = vpop.permute.xlu0 %958
      %v960 = vsel %vm215, %v957, %v959
      %v961 = vsel %vm215, %v959, %v957
      %s962 = scalar_lea.vmem [#allocation4], 37
      %v963 = vld [vmem:[%s962] ss:$8 sm:$0x3]
      %s964 = scalar_lea.vmem [#allocation4], 134
      %v965 = vld [vmem:[%s964] ss:$8 sm:$0x3]
      %v967 = vperm.slane %v963, 0
      %v968 = vperm.slane %v963, 1
      %v971 = vmul.f32 %v967, %v950
      %v972 = vmul.f32 %v968, %v949
      %v973 = vadd.f32 %v938, %v971
      %v974 = vadd.f32 %v939, %v972
      %v976 = vperm.slane %v965, 0
      %v977 = vperm.slane %v965, 1
      %v980 = vmul.f32 %v976, %v961
      %v981 = vmul.f32 %v977, %v960
      %v982 = vadd.f32 %v973, %v980
      %v983 = vadd.f32 %v974, %v981
      %984 = vst [vmem:[#allocation1] ss:$4 sm:$0xff] %v182
      %v985 = vld.sshfl [vmem:[#allocation1] sm:$0xff pattern:$0x73625140]
      %v986 = vld.sshfl [vmem:[#allocation1 + $0x8] sm:$0xff pattern:$0x73625140]
      %989 = vrot.lane.b32.xlu0 %v985, 2
      %v990 = vpop.permute.xlu0 %989
      %991 = vrot.lane.b32.xlu0 %v986, 2
      %v992 = vpop.permute.xlu0 %991
      %v993 = vsel %vm249, %v990, %v992
      %v994 = vsel %vm249, %v992, %v990
      %995 = vst [vmem:[#allocation1] ss:$4 sm:$0xff] %v183
      %v996 = vld.sshfl [vmem:[#allocation1] sm:$0xff pattern:$0x73625140]
      %v997 = vld.sshfl [vmem:[#allocation1 + $0x8] sm:$0xff pattern:$0x73625140]
      %1000 = vrot.lane.b32.xlu0 %v996, 2
      %v1001 = vpop.permute.xlu0 %1000
      %1002 = vrot.lane.b32.xlu0 %v997, 2
      %v1003 = vpop.permute.xlu0 %1002
      %v1004 = vsel %vm249, %v1001, %v1003
      %v1005 = vsel %vm249, %v1003, %v1001
      %s1006 = scalar_lea.vmem [#allocation4], 38
      %v1007 = vld [vmem:[%s1006] ss:$8 sm:$0x3]
      %s1008 = scalar_lea.vmem [#allocation4], 135
      %v1009 = vld [vmem:[%s1008] ss:$8 sm:$0x3]
      %v1011 = vperm.slane %v1007, 0
      %v1012 = vperm.slane %v1007, 1
      %v1015 = vmul.f32 %v1011, %v994
      %v1016 = vmul.f32 %v1012, %v993
      %v1017 = vadd.f32 %v982, %v1015
      %v1018 = vadd.f32 %v983, %v1016
      %v1020 = vperm.slane %v1009, 0
      %v1021 = vperm.slane %v1009, 1
      %v1024 = vmul.f32 %v1020, %v1005
      %v1025 = vmul.f32 %v1021, %v1004
      %v1026 = vadd.f32 %v1017, %v1024
      %v1027 = vadd.f32 %v1018, %v1025
      %1028 = vst [vmem:[#allocation1] ss:$4 sm:$0xff] %v182
      %v1029 = vld.sshfl [vmem:[#allocation1] sm:$0xff pattern:$0x73625140]
      %v1030 = vld.sshfl [vmem:[#allocation1 + $0x8] sm:$0xff pattern:$0x73625140]
      %1033 = vrot.lane.b32.xlu0 %v1029, 1
      %v1034 = vpop.permute.xlu0 %1033
      %1035 = vrot.lane.b32.xlu0 %v1030, 1
      %v1036 = vpop.permute.xlu0 %1035
      %v1037 = vsel %vm284, %v1034, %v1036
      %v1038 = vsel %vm284, %v1036, %v1034
      %1039 = vst [vmem:[#allocation1] ss:$4 sm:$0xff] %v183
      %v1040 = vld.sshfl [vmem:[#allocation1] sm:$0xff pattern:$0x73625140]
      %v1041 = vld.sshfl [vmem:[#allocation1 + $0x8] sm:$0xff pattern:$0x73625140]
      %1044 = vrot.lane.b32.xlu0 %v1040, 1
      %v1045 = vpop.permute.xlu0 %1044
      %1046 = vrot.lane.b32.xlu0 %v1041, 1
      %v1047 = vpop.permute.xlu0 %1046
      %v1048 = vsel %vm284, %v1045, %v1047
      %v1049 = vsel %vm284, %v1047, %v1045
      %s1050 = scalar_lea.vmem [#allocation4], 39
      %v1051 = vld [vmem:[%s1050] ss:$8 sm:$0x3]
      %s1052 = scalar_lea.vmem [#allocation4], 144
      %v1053 = vld [vmem:[%s1052] ss:$8 sm:$0x3]
      %v1055 = vperm.slane %v1051, 0
      %v1056 = vperm.slane %v1051, 1
      %v1059 = vmul.f32 %v1055, %v1038
      %v1060 = vmul.f32 %v1056, %v1037
      %v1061 = vadd.f32 %v1026, %v1059
      %v1062 = vadd.f32 %v1027, %v1060
      %v1064 = vperm.slane %v1053, 0
      %v1065 = vperm.slane %v1053, 1
      %v1068 = vmul.f32 %v1064, %v1049
      %v1069 = vmul.f32 %v1065, %v1048
      %v1070 = vadd.f32 %v1061, %v1068
      %v1071 = vadd.f32 %v1062, %v1069
      %s1072 = scalar_lea.vmem [#allocation4], 48
      %v1073 = vld [vmem:[%s1072] ss:$8 sm:$0x3]
      %s1074 = scalar_lea.vmem [#allocation4], 145
      %v1075 = vld [vmem:[%s1074] ss:$8 sm:$0x3]
      %v1077 = vperm.slane %v1073, 0
      %v1078 = vperm.slane %v1073, 1
      %1081 = vst [vmem:[#allocation1] ss:$4 sm:$0xff] %v182
      %v1082 = vld.sshfl [vmem:[#allocation1] sm:$0xff pattern:$0x73625140]
      %v1083 = vld.sshfl [vmem:[#allocation1 + $0x8] sm:$0xff pattern:$0x73625140]
      %v1086 = vmul.f32 %v1077, %v1082
      %v1087 = vmul.f32 %v1078, %v1083
      %v1088 = vadd.f32 %v1070, %v1086
      %v1089 = vadd.f32 %v1071, %v1087
      %v1091 = vperm.slane %v1075, 0
      %v1092 = vperm.slane %v1075, 1
      %1095 = vst [vmem:[#allocation1] ss:$4 sm:$0xff] %v183
      %v1096 = vld.sshfl [vmem:[#allocation1] sm:$0xff pattern:$0x73625140]
      %v1097 = vld.sshfl [vmem:[#allocation1 + $0x8] sm:$0xff pattern:$0x73625140]
      %v1100 = vmul.f32 %v1091, %v1096
      %v1101 = vmul.f32 %v1092, %v1097
      %v1102 = vadd.f32 %v1088, %v1100
      %v1103 = vadd.f32 %v1089, %v1101
      %1104 = vst [vmem:[#allocation1] ss:$4 sm:$0xff] %v182
      %v1105 = vld.sshfl [vmem:[#allocation1] sm:$0xff pattern:$0x73625140]
      %v1106 = vld.sshfl [vmem:[#allocation1 + $0x8] sm:$0xff pattern:$0x73625140]
      %1109 = vrot.lane.b32.xlu0 %v1105, 127
      %v1110 = vpop.permute.xlu0 %1109
      %1111 = vrot.lane.b32.xlu0 %v1106, 127
      %v1112 = vpop.permute.xlu0 %1111
      %v1113 = vsel %vm341, %v1110, %v1112
      %v1114 = vsel %vm341, %v1112, %v1110
      %1115 = vst [vmem:[#allocation1] ss:$4 sm:$0xff] %v183
      %v1116 = vld.sshfl [vmem:[#allocation1] sm:$0xff pattern:$0x73625140]
      %v1117 = vld.sshfl [vmem:[#allocation1 + $0x8] sm:$0xff pattern:$0x73625140]
      %1120 = vrot.lane.b32.xlu0 %v1116, 127
      %v1121 = vpop.permute.xlu0 %1120
      %1122 = vrot.lane.b32.xlu0 %v1117, 127
      %v1123 = vpop.permute.xlu0 %1122
      %v1124 = vsel %vm341, %v1121, %v1123
      %v1125 = vsel %vm341, %v1123, %v1121
      %s1126 = scalar_lea.vmem [#allocation4], 49
      %v1127 = vld [vmem:[%s1126] ss:$8 sm:$0x3]
      %s1128 = scalar_lea.vmem [#allocation4], 146
      %v1129 = vld [vmem:[%s1128] ss:$8 sm:$0x3]
      %v1131 = vperm.slane %v1127, 0
      %v1132 = vperm.slane %v1127, 1
      %v1135 = vmul.f32 %v1131, %v1113
      %v1136 = vmul.f32 %v1132, %v1114
      %v1137 = vadd.f32 %v1102, %v1135
      %v1138 = vadd.f32 %v1103, %v1136
      %v1140 = vperm.slane %v1129, 0
      %v1141 = vperm.slane %v1129, 1
      %v1144 = vmul.f32 %v1140, %v1124
      %v1145 = vmul.f32 %v1141, %v1125
      %v1146 = vadd.f32 %v1137, %v1144
      %v1147 = vadd.f32 %v1138, %v1145
      %1148 = vst [vmem:[#allocation1] ss:$4 sm:$0xff] %v182
      %v1149 = vld.sshfl [vmem:[#allocation1] sm:$0xff pattern:$0x73625140]
      %v1150 = vld.sshfl [vmem:[#allocation1 + $0x8] sm:$0xff pattern:$0x73625140]
      %1153 = vrot.lane.b32.xlu0 %v1149, 126
      %v1154 = vpop.permute.xlu0 %1153
      %1155 = vrot.lane.b32.xlu0 %v1150, 126
      %v1156 = vpop.permute.xlu0 %1155
      %v1157 = vsel %vm376, %v1154, %v1156
      %v1158 = vsel %vm376, %v1156, %v1154
      %1159 = vst [vmem:[#allocation1] ss:$4 sm:$0xff] %v183
      %v1160 = vld.sshfl [vmem:[#allocation1] sm:$0xff pattern:$0x73625140]
      %v1161 = vld.sshfl [vmem:[#allocation1 + $0x8] sm:$0xff pattern:$0x73625140]
      %1164 = vrot.lane.b32.xlu0 %v1160, 126
      %v1165 = vpop.permute.xlu0 %1164
      %1166 = vrot.lane.b32.xlu0 %v1161, 126
      %v1167 = vpop.permute.xlu0 %1166
      %v1168 = vsel %vm376, %v1165, %v1167
      %v1169 = vsel %vm376, %v1167, %v1165
      %s1170 = scalar_lea.vmem [#allocation4], 50
      %v1171 = vld [vmem:[%s1170] ss:$8 sm:$0x3]
      %s1172 = scalar_lea.vmem [#allocation4], 147
      %v1173 = vld [vmem:[%s1172] ss:$8 sm:$0x3]
      %v1175 = vperm.slane %v1171, 0
      %v1176 = vperm.slane %v1171, 1
      %v1179 = vmul.f32 %v1175, %v1157
      %v1180 = vmul.f32 %v1176, %v1158
      %v1181 = vadd.f32 %v1146, %v1179
      %v1182 = vadd.f32 %v1147, %v1180
      %v1184 = vperm.slane %v1173, 0
      %v1185 = vperm.slane %v1173, 1
      %v1188 = vmul.f32 %v1184, %v1168
      %v1189 = vmul.f32 %v1185, %v1169
      %v1190 = vadd.f32 %v1181, %v1188
      %v1191 = vadd.f32 %v1182, %v1189
      %1192 = vst [vmem:[#allocation1] ss:$4 sm:$0xff] %v182
      %v1193 = vld.sshfl [vmem:[#allocation1] sm:$0xff pattern:$0x73625140]
      %v1194 = vld.sshfl [vmem:[#allocation1 + $0x8] sm:$0xff pattern:$0x73625140]
      %1197 = vrot.lane.b32.xlu0 %v1193, 125
      %v1198 = vpop.permute.xlu0 %1197
      %1199 = vrot.lane.b32.xlu0 %v1194, 125
      %v1200 = vpop.permute.xlu0 %1199
      %v1201 = vsel %vm411, %v1198, %v1200
      %v1202 = vsel %vm411, %v1200, %v1198
      %1203 = vst [vmem:[#allocation1] ss:$4 sm:$0xff] %v183
      %v1204 = vld.sshfl [vmem:[#allocation1] sm:$0xff pattern:$0x73625140]
      %v1205 = vld.sshfl [vmem:[#allocation1 + $0x8] sm:$0xff pattern:$0x73625140]
      %1208 = vrot.lane.b32.xlu0 %v1204, 125
      %v1209 = vpop.permute.xlu0 %1208
      %1210 = vrot.lane.b32.xlu0 %v1205, 125
      %v1211 = vpop.permute.xlu0 %1210
      %v1212 = vsel %vm411, %v1209, %v1211
      %v1213 = vsel %vm411, %v1211, %v1209
      %s1214 = scalar_lea.vmem [#allocation4], 51
      %v1215 = vld [vmem:[%s1214] ss:$8 sm:$0x3]
      %s1216 = scalar_lea.vmem [#allocation4], 148
      %v1217 = vld [vmem:[%s1216] ss:$8 sm:$0x3]
      %v1219 = vperm.slane %v1215, 0
      %v1220 = vperm.slane %v1215, 1
      %v1223 = vmul.f32 %v1219, %v1201
      %v1224 = vmul.f32 %v1220, %v1202
      %v1225 = vadd.f32 %v1190, %v1223
      %v1226 = vadd.f32 %v1191, %v1224
      %v1228 = vperm.slane %v1217, 0
      %v1229 = vperm.slane %v1217, 1
      %v1232 = vmul.f32 %v1228, %v1212
      %v1233 = vmul.f32 %v1229, %v1213
      %v1234 = vadd.f32 %v1225, %v1232
      %v1235 = vadd.f32 %v1226, %v1233
      %1236 = vst [vmem:[#allocation1] ss:$4 sm:$0xff] %v182
      %v1237 = vld.sshfl [vmem:[#allocation1] sm:$0xff pattern:$0x73625140]
      %v1238 = vld.sshfl [vmem:[#allocation1 + $0x8] sm:$0xff pattern:$0x73625140]
      %1241 = vrot.lane.b32.xlu0 %v1237, 112
      %v1242 = vpop.permute.xlu0 %1241
      %1243 = vrot.lane.b32.xlu0 %v1238, 112
      %v1244 = vpop.permute.xlu0 %1243
      %vm1245 = vcmp.lt.s32.totalorder %v195, 112
      %v1246 = vsel %vm1245, %v1242, %v1244
      %v1247 = vsel %vm1245, %v1244, %v1242
      %1248 = vst [vmem:[#allocation1] ss:$4 sm:$0xff] %v183
      %v1249 = vld.sshfl [vmem:[#allocation1] sm:$0xff pattern:$0x73625140]
      %v1250 = vld.sshfl [vmem:[#allocation1 + $0x8] sm:$0xff pattern:$0x73625140]
      %1253 = vrot.lane.b32.xlu0 %v1249, 112
      %v1254 = vpop.permute.xlu0 %1253
      %1255 = vrot.lane.b32.xlu0 %v1250, 112
      %v1256 = vpop.permute.xlu0 %1255
      %v1257 = vsel %vm1245, %v1254, %v1256
      %v1258 = vsel %vm1245, %v1256, %v1254
      %1259 = vrot.lane.b32.xlu0 %v1246, 3
      %v1260 = vpop.permute.xlu0 %1259
      %1261 = vrot.lane.b32.xlu0 %v1247, 3
      %v1262 = vpop.permute.xlu0 %1261
      %v1263 = vsel %vm215, %v1260, %v1262
      %v1264 = vsel %vm215, %v1262, %v1260
      %1265 = vrot.lane.b32.xlu0 %v1257, 3
      %v1266 = vpop.permute.xlu0 %1265
      %1267 = vrot.lane.b32.xlu0 %v1258, 3
      %v1268 = vpop.permute.xlu0 %1267
      %v1269 = vsel %vm215, %v1266, %v1268
      %v1270 = vsel %vm215, %v1268, %v1266
      %s1271 = scalar_lea.vmem [#allocation4], 52
      %v1272 = vld [vmem:[%s1271] ss:$8 sm:$0x3]
      %s1273 = scalar_lea.vmem [#allocation4], 149
      %v1274 = vld [vmem:[%s1273] ss:$8 sm:$0x3]
      %v1276 = vperm.slane %v1272, 0
      %v1277 = vperm.slane %v1272, 1
      %v1280 = vmul.f32 %v1276, %v1264
      %v1281 = vmul.f32 %v1277, %v1263
      %v1282 = vadd.f32 %v1234, %v1280
      %v1283 = vadd.f32 %v1235, %v1281
      %v1285 = vperm.slane %v1274, 0
      %v1286 = vperm.slane %v1274, 1
      %v1289 = vmul.f32 %v1285, %v1270
      %v1290 = vmul.f32 %v1286, %v1269
      %v1291 = vadd.f32 %v1282, %v1289
      %v1292 = vadd.f32 %v1283, %v1290
      %1293 = vrot.lane.b32.xlu0 %v1246, 2
      %v1294 = vpop.permute.xlu0 %1293
      %1295 = vrot.lane.b32.xlu0 %v1247, 2
      %v1296 = vpop.permute.xlu0 %1295
      %v1297 = vsel %vm249, %v1294, %v1296
      %v1298 = vsel %vm249, %v1296, %v1294
      %1299 = vrot.lane.b32.xlu0 %v1257, 2
      %v1300 = vpop.permute.xlu0 %1299
      %1301 = vrot.lane.b32.xlu0 %v1258, 2
      %v1302 = vpop.permute.xlu0 %1301
      %v1303 = vsel %vm249, %v1300, %v1302
      %v1304 = vsel %vm249, %v1302, %v1300
      %s1305 = scalar_lea.vmem [#allocation4], 53
      %v1306 = vld [vmem:[%s1305] ss:$8 sm:$0x3]
      %s1307 = scalar_lea.vmem [#allocation4], 150
      %v1308 = vld [vmem:[%s1307] ss:$8 sm:$0x3]
      %v1310 = vperm.slane %v1306, 0
      %v1311 = vperm.slane %v1306, 1
      %v1314 = vmul.f32 %v1310, %v1298
      %v1315 = vmul.f32 %v1311, %v1297
      %v1316 = vadd.f32 %v1291, %v1314
      %v1317 = vadd.f32 %v1292, %v1315
      %v1319 = vperm.slane %v1308, 0
      %v1320 = vperm.slane %v1308, 1
      %v1323 = vmul.f32 %v1319, %v1304
      %v1324 = vmul.f32 %v1320, %v1303
      %v1325 = vadd.f32 %v1316, %v1323
      %v1326 = vadd.f32 %v1317, %v1324
      %1327 = vrot.lane.b32.xlu0 %v1246, 1
      %v1328 = vpop.permute.xlu0 %1327
      %1329 = vrot.lane.b32.xlu0 %v1247, 1
      %v1330 = vpop.permute.xlu0 %1329
      %v1331 = vsel %vm284, %v1328, %v1330
      %v1332 = vsel %vm284, %v1330, %v1328
      %1333 = vrot.lane.b32.xlu0 %v1257, 1
      %v1334 = vpop.permute.xlu0 %1333
      %1335 = vrot.lane.b32.xlu0 %v1258, 1
      %v1336 = vpop.permute.xlu0 %1335
      %v1337 = vsel %vm284, %v1334, %v1336
      %v1338 = vsel %vm284, %v1336, %v1334
      %s1339 = scalar_lea.vmem [#allocation4], 54
      %v1340 = vld [vmem:[%s1339] ss:$8 sm:$0x3]
      %s1341 = scalar_lea.vmem [#allocation4], 151
      %v1342 = vld [vmem:[%s1341] ss:$8 sm:$0x3]
      %v1344 = vperm.slane %v1340, 0
      %v1345 = vperm.slane %v1340, 1
      %v1348 = vmul.f32 %v1344, %v1332
      %v1349 = vmul.f32 %v1345, %v1331
      %v1350 = vadd.f32 %v1325, %v1348
      %v1351 = vadd.f32 %v1326, %v1349
      %v1353 = vperm.slane %v1342, 0
      %v1354 = vperm.slane %v1342, 1
      %v1357 = vmul.f32 %v1353, %v1338
      %v1358 = vmul.f32 %v1354, %v1337
      %v1359 = vadd.f32 %v1350, %v1357
      %v1360 = vadd.f32 %v1351, %v1358
      %s1361 = scalar_lea.vmem [#allocation4], 55
      %v1362 = vld [vmem:[%s1361] ss:$8 sm:$0x3]
      %s1363 = scalar_lea.vmem [#allocation4], 160
      %v1364 = vld [vmem:[%s1363] ss:$8 sm:$0x3]
      %v1366 = vperm.slane %v1362, 0
      %v1367 = vperm.slane %v1362, 1
      %v1370 = vmul.f32 %v1366, %v1246
      %v1371 = vmul.f32 %v1367, %v1247
      %v1372 = vadd.f32 %v1359, %v1370
      %v1373 = vadd.f32 %v1360, %v1371
      %v1375 = vperm.slane %v1364, 0
      %v1376 = vperm.slane %v1364, 1
      %v1379 = vmul.f32 %v1375, %v1257
      %v1380 = vmul.f32 %v1376, %v1258
      %v1381 = vadd.f32 %v1372, %v1379
      %v1382 = vadd.f32 %v1373, %v1380
      %1383 = vrot.lane.b32.xlu0 %v1246, 127
      %v1384 = vpop.permute.xlu0 %1383
      %1385 = vrot.lane.b32.xlu0 %v1247, 127
      %v1386 = vpop.permute.xlu0 %1385
      %v1387 = vsel %vm341, %v1384, %v1386
      %v1388 = vsel %vm341, %v1386, %v1384
      %1389 = vrot.lane.b32.xlu0 %v1257, 127
      %v1390 = vpop.permute.xlu0 %1389
      %1391 = vrot.lane.b32.xlu0 %v1258, 127
      %v1392 = vpop.permute.xlu0 %1391
      %v1393 = vsel %vm341, %v1390, %v1392
      %v1394 = vsel %vm341, %v1392, %v1390
      %s1395 = scalar_lea.vmem [#allocation4], 64
      %v1396 = vld [vmem:[%s1395] ss:$8 sm:$0x3]
      %s1397 = scalar_lea.vmem [#allocation4], 161
      %v1398 = vld [vmem:[%s1397] ss:$8 sm:$0x3]
      %v1400 = vperm.slane %v1396, 0
      %v1401 = vperm.slane %v1396, 1
      %v1404 = vmul.f32 %v1400, %v1387
      %v1405 = vmul.f32 %v1401, %v1388
      %v1406 = vadd.f32 %v1381, %v1404
      %v1407 = vadd.f32 %v1382, %v1405
      %v1409 = vperm.slane %v1398, 0
      %v1410 = vperm.slane %v1398, 1
      %v1413 = vmul.f32 %v1409, %v1393
      %v1414 = vmul.f32 %v1410, %v1394
      %v1415 = vadd.f32 %v1406, %v1413
      %v1416 = vadd.f32 %v1407, %v1414
      %1417 = vrot.lane.b32.xlu0 %v1246, 126
      %v1418 = vpop.permute.xlu0 %1417
      %1419 = vrot.lane.b32.xlu0 %v1247, 126
      %v1420 = vpop.permute.xlu0 %1419
      %v1421 = vsel %vm376, %v1418, %v1420
      %v1422 = vsel %vm376, %v1420, %v1418
      %1423 = vrot.lane.b32.xlu0 %v1257, 126
      %v1424 = vpop.permute.xlu0 %1423
      %1425 = vrot.lane.b32.xlu0 %v1258, 126
      %v1426 = vpop.permute.xlu0 %1425
      %v1427 = vsel %vm376, %v1424, %v1426
      %v1428 = vsel %vm376, %v1426, %v1424
      %s1429 = scalar_lea.vmem [#allocation4], 65
      %v1430 = vld [vmem:[%s1429] ss:$8 sm:$0x3]
      %s1431 = scalar_lea.vmem [#allocation4], 162
      %v1432 = vld [vmem:[%s1431] ss:$8 sm:$0x3]
      %v1434 = vperm.slane %v1430, 0
      %v1435 = vperm.slane %v1430, 1
      %v1438 = vmul.f32 %v1434, %v1421
      %v1439 = vmul.f32 %v1435, %v1422
      %v1440 = vadd.f32 %v1415, %v1438
      %v1441 = vadd.f32 %v1416, %v1439
      %v1443 = vperm.slane %v1432, 0
      %v1444 = vperm.slane %v1432, 1
      %v1447 = vmul.f32 %v1443, %v1427
      %v1448 = vmul.f32 %v1444, %v1428
      %v1449 = vadd.f32 %v1440, %v1447
      %v1450 = vadd.f32 %v1441, %v1448
      %1451 = vrot.lane.b32.xlu0 %v1246, 125
      %v1452 = vpop.permute.xlu0 %1451
      %1453 = vrot.lane.b32.xlu0 %v1247, 125
      %v1454 = vpop.permute.xlu0 %1453
      %v1455 = vsel %vm411, %v1452, %v1454
      %v1456 = vsel %vm411, %v1454, %v1452
      %1457 = vrot.lane.b32.xlu0 %v1257, 125
      %v1458 = vpop.permute.xlu0 %1457
      %1459 = vrot.lane.b32.xlu0 %v1258, 125
      %v1460 = vpop.permute.xlu0 %1459
      %v1461 = vsel %vm411, %v1458, %v1460
      %v1462 = vsel %vm411, %v1460, %v1458
      %s1463 = scalar_lea.vmem [#allocation4], 66
      %v1464 = vld [vmem:[%s1463] ss:$8 sm:$0x3]
      %s1465 = scalar_lea.vmem [#allocation4], 163
      %v1466 = vld [vmem:[%s1465] ss:$8 sm:$0x3]
      %v1468 = vperm.slane %v1464, 0
      %v1469 = vperm.slane %v1464, 1
      %v1472 = vmul.f32 %v1468, %v1455
      %v1473 = vmul.f32 %v1469, %v1456
      %v1474 = vadd.f32 %v1449, %v1472
      %v1475 = vadd.f32 %v1450, %v1473
      %v1477 = vperm.slane %v1466, 0
      %v1478 = vperm.slane %v1466, 1
      %v1481 = vmul.f32 %v1477, %v1461
      %v1482 = vmul.f32 %v1478, %v1462
      %v1483 = vadd.f32 %v1474, %v1481
      %v1484 = vadd.f32 %v1475, %v1482
      %1485 = vst [vmem:[#allocation1] ss:$4 sm:$0xff] %v182
      %v1486 = vld.sshfl [vmem:[#allocation1] sm:$0xff pattern:$0x73625140]
      %v1487 = vld.sshfl [vmem:[#allocation1 + $0x8] sm:$0xff pattern:$0x73625140]
      %1490 = vrot.lane.b32.xlu0 %v1486, 96
      %v1491 = vpop.permute.xlu0 %1490
      %1492 = vrot.lane.b32.xlu0 %v1487, 96
      %v1493 = vpop.permute.xlu0 %1492
      %vm1494 = vcmp.lt.s32.totalorder %v195, 96
      %v1495 = vsel %vm1494, %v1491, %v1493
      %v1496 = vsel %vm1494, %v1493, %v1491
      %1497 = vst [vmem:[#allocation1] ss:$4 sm:$0xff] %v183
      %v1498 = vld.sshfl [vmem:[#allocation1] sm:$0xff pattern:$0x73625140]
      %v1499 = vld.sshfl [vmem:[#allocation1 + $0x8] sm:$0xff pattern:$0x73625140]
      %1502 = vrot.lane.b32.xlu0 %v1498, 96
      %v1503 = vpop.permute.xlu0 %1502
      %1504 = vrot.lane.b32.xlu0 %v1499, 96
      %v1505 = vpop.permute.xlu0 %1504
      %v1506 = vsel %vm1494, %v1503, %v1505
      %v1507 = vsel %vm1494, %v1505, %v1503
      %1508 = vrot.lane.b32.xlu0 %v1495, 3
      %v1509 = vpop.permute.xlu0 %1508
      %1510 = vrot.lane.b32.xlu0 %v1496, 3
      %v1511 = vpop.permute.xlu0 %1510
      %v1512 = vsel %vm215, %v1509, %v1511
      %v1513 = vsel %vm215, %v1511, %v1509
      %1514 = vrot.lane.b32.xlu0 %v1506, 3
      %v1515 = vpop.permute.xlu0 %1514
      %1516 = vrot.lane.b32.xlu0 %v1507, 3
      %v1517 = vpop.permute.xlu0 %1516
      %v1518 = vsel %vm215, %v1515, %v1517
      %v1519 = vsel %vm215, %v1517, %v1515
      %s1520 = scalar_lea.vmem [#allocation4], 67
      %v1521 = vld [vmem:[%s1520] ss:$8 sm:$0x3]
      %s1522 = scalar_lea.vmem [#allocation4], 164
      %v1523 = vld [vmem:[%s1522] ss:$8 sm:$0x3]
      %v1525 = vperm.slane %v1521, 0
      %v1526 = vperm.slane %v1521, 1
      %v1529 = vmul.f32 %v1525, %v1513
      %v1530 = vmul.f32 %v1526, %v1512
      %v1531 = vadd.f32 %v1483, %v1529
      %v1532 = vadd.f32 %v1484, %v1530
      %v1534 = vperm.slane %v1523, 0
      %v1535 = vperm.slane %v1523, 1
      %v1538 = vmul.f32 %v1534, %v1519
      %v1539 = vmul.f32 %v1535, %v1518
      %v1540 = vadd.f32 %v1531, %v1538
      %v1541 = vadd.f32 %v1532, %v1539
      %1542 = vrot.lane.b32.xlu0 %v1495, 2
      %v1543 = vpop.permute.xlu0 %1542
      %1544 = vrot.lane.b32.xlu0 %v1496, 2
      %v1545 = vpop.permute.xlu0 %1544
      %v1546 = vsel %vm249, %v1543, %v1545
      %v1547 = vsel %vm249, %v1545, %v1543
      %1548 = vrot.lane.b32.xlu0 %v1506, 2
      %v1549 = vpop.permute.xlu0 %1548
      %1550 = vrot.lane.b32.xlu0 %v1507, 2
      %v1551 = vpop.permute.xlu0 %1550
      %v1552 = vsel %vm249, %v1549, %v1551
      %v1553 = vsel %vm249, %v1551, %v1549
      %s1554 = scalar_lea.vmem [#allocation4], 68
      %v1555 = vld [vmem:[%s1554] ss:$8 sm:$0x3]
      %s1556 = scalar_lea.vmem [#allocation4], 165
      %v1557 = vld [vmem:[%s1556] ss:$8 sm:$0x3]
      %v1559 = vperm.slane %v1555, 0
      %v1560 = vperm.slane %v1555, 1
      %v1563 = vmul.f32 %v1559, %v1547
      %v1564 = vmul.f32 %v1560, %v1546
      %v1565 = vadd.f32 %v1540, %v1563
      %v1566 = vadd.f32 %v1541, %v1564
      %v1568 = vperm.slane %v1557, 0
      %v1569 = vperm.slane %v1557, 1
      %v1572 = vmul.f32 %v1568, %v1553
      %v1573 = vmul.f32 %v1569, %v1552
      %v1574 = vadd.f32 %v1565, %v1572
      %v1575 = vadd.f32 %v1566, %v1573
      %1576 = vrot.lane.b32.xlu0 %v1495, 1
      %v1577 = vpop.permute.xlu0 %1576
      %1578 = vrot.lane.b32.xlu0 %v1496, 1
      %v1579 = vpop.permute.xlu0 %1578
      %v1580 = vsel %vm284, %v1577, %v1579
      %v1581 = vsel %vm284, %v1579, %v1577
      %1582 = vrot.lane.b32.xlu0 %v1506, 1
      %v1583 = vpop.permute.xlu0 %1582
      %1584 = vrot.lane.b32.xlu0 %v1507, 1
      %v1585 = vpop.permute.xlu0 %1584
      %v1586 = vsel %vm284, %v1583, %v1585
      %v1587 = vsel %vm284, %v1585, %v1583
      %s1588 = scalar_lea.vmem [#allocation4], 69
      %v1589 = vld [vmem:[%s1588] ss:$8 sm:$0x3]
      %s1590 = scalar_lea.vmem [#allocation4], 166
      %v1591 = vld [vmem:[%s1590] ss:$8 sm:$0x3]
      %v1593 = vperm.slane %v1589, 0
      %v1594 = vperm.slane %v1589, 1
      %v1597 = vmul.f32 %v1593, %v1581
      %v1598 = vmul.f32 %v1594, %v1580
      %v1599 = vadd.f32 %v1574, %v1597
      %v1600 = vadd.f32 %v1575, %v1598
      %v1602 = vperm.slane %v1591, 0
      %v1603 = vperm.slane %v1591, 1
      %v1606 = vmul.f32 %v1602, %v1587
      %v1607 = vmul.f32 %v1603, %v1586
      %v1608 = vadd.f32 %v1599, %v1606
      %v1609 = vadd.f32 %v1600, %v1607
      %s1610 = scalar_lea.vmem [#allocation4], 70
      %v1611 = vld [vmem:[%s1610] ss:$8 sm:$0x3]
      %s1612 = scalar_lea.vmem [#allocation4], 167
      %v1613 = vld [vmem:[%s1612] ss:$8 sm:$0x3]
      %v1615 = vperm.slane %v1611, 0
      %v1616 = vperm.slane %v1611, 1
      %v1619 = vmul.f32 %v1615, %v1495
      %v1620 = vmul.f32 %v1616, %v1496
      %v1621 = vadd.f32 %v1608, %v1619
      %v1622 = vadd.f32 %v1609, %v1620
      %v1624 = vperm.slane %v1613, 0
      %v1625 = vperm.slane %v1613, 1
      %v1628 = vmul.f32 %v1624, %v1506
      %v1629 = vmul.f32 %v1625, %v1507
      %v1630 = vadd.f32 %v1621, %v1628
      %v1631 = vadd.f32 %v1622, %v1629
      %1632 = vrot.lane.b32.xlu0 %v1495, 127
      %v1633 = vpop.permute.xlu0 %1632
      %1634 = vrot.lane.b32.xlu0 %v1496, 127
      %v1635 = vpop.permute.xlu0 %1634
      %v1636 = vsel %vm341, %v1633, %v1635
      %v1637 = vsel %vm341, %v1635, %v1633
      %1638 = vrot.lane.b32.xlu0 %v1506, 127
      %v1639 = vpop.permute.xlu0 %1638
      %1640 = vrot.lane.b32.xlu0 %v1507, 127
      %v1641 = vpop.permute.xlu0 %1640
      %v1642 = vsel %vm341, %v1639, %v1641
      %v1643 = vsel %vm341, %v1641, %v1639
      %s1644 = scalar_lea.vmem [#allocation4], 71
      %v1645 = vld [vmem:[%s1644] ss:$8 sm:$0x3]
      %s1646 = scalar_lea.vmem [#allocation4], 176
      %v1647 = vld [vmem:[%s1646] ss:$8 sm:$0x3]
      %v1649 = vperm.slane %v1645, 0
      %v1650 = vperm.slane %v1645, 1
      %v1653 = vmul.f32 %v1649, %v1636
      %v1654 = vmul.f32 %v1650, %v1637
      %v1655 = vadd.f32 %v1630, %v1653
      %v1656 = vadd.f32 %v1631, %v1654
      %v1658 = vperm.slane %v1647, 0
      %v1659 = vperm.slane %v1647, 1
      %v1662 = vmul.f32 %v1658, %v1642
      %v1663 = vmul.f32 %v1659, %v1643
      %v1664 = vadd.f32 %v1655, %v1662
      %v1665 = vadd.f32 %v1656, %v1663
      %1666 = vrot.lane.b32.xlu0 %v1495, 126
      %v1667 = vpop.permute.xlu0 %1666
      %1668 = vrot.lane.b32.xlu0 %v1496, 126
      %v1669 = vpop.permute.xlu0 %1668
      %v1670 = vsel %vm376, %v1667, %v1669
      %v1671 = vsel %vm376, %v1669, %v1667
      %1672 = vrot.lane.b32.xlu0 %v1506, 126
      %v1673 = vpop.permute.xlu0 %1672
      %1674 = vrot.lane.b32.xlu0 %v1507, 126
      %v1675 = vpop.permute.xlu0 %1674
      %v1676 = vsel %vm376, %v1673, %v1675
      %v1677 = vsel %vm376, %v1675, %v1673
      %s1678 = scalar_lea.vmem [#allocation4], 80
      %v1679 = vld [vmem:[%s1678] ss:$8 sm:$0x3]
      %s1680 = scalar_lea.vmem [#allocation4], 177
      %v1681 = vld [vmem:[%s1680] ss:$8 sm:$0x3]
      %v1683 = vperm.slane %v1679, 0
      %v1684 = vperm.slane %v1679, 1
      %v1687 = vmul.f32 %v1683, %v1670
      %v1688 = vmul.f32 %v1684, %v1671
      %v1689 = vadd.f32 %v1664, %v1687
      %v1690 = vadd.f32 %v1665, %v1688
      %v1692 = vperm.slane %v1681, 0
      %v1693 = vperm.slane %v1681, 1
      %v1696 = vmul.f32 %v1692, %v1676
      %v1697 = vmul.f32 %v1693, %v1677
      %v1698 = vadd.f32 %v1689, %v1696
      %v1699 = vadd.f32 %v1690, %v1697
      %1700 = vrot.lane.b32.xlu0 %v1495, 125
      %v1701 = vpop.permute.xlu0 %1700
      %1702 = vrot.lane.b32.xlu0 %v1496, 125
      %v1703 = vpop.permute.xlu0 %1702
      %v1704 = vsel %vm411, %v1701, %v1703
      %v1705 = vsel %vm411, %v1703, %v1701
      %1706 = vrot.lane.b32.xlu0 %v1506, 125
      %v1707 = vpop.permute.xlu0 %1706
      %1708 = vrot.lane.b32.xlu0 %v1507, 125
      %v1709 = vpop.permute.xlu0 %1708
      %v1710 = vsel %vm411, %v1707, %v1709
      %v1711 = vsel %vm411, %v1709, %v1707
      %s1712 = scalar_lea.vmem [#allocation4], 81
      %v1713 = vld [vmem:[%s1712] ss:$8 sm:$0x3]
      %s1714 = scalar_lea.vmem [#allocation4], 178
      %v1715 = vld [vmem:[%s1714] ss:$8 sm:$0x3]
      %v1717 = vperm.slane %v1713, 0
      %v1718 = vperm.slane %v1713, 1
      %v1721 = vmul.f32 %v1717, %v1704
      %v1722 = vmul.f32 %v1718, %v1705
      %v1723 = vadd.f32 %v1698, %v1721
      %v1724 = vadd.f32 %v1699, %v1722
      %v1726 = vperm.slane %v1715, 0
      %v1727 = vperm.slane %v1715, 1
      %v1730 = vmul.f32 %v1726, %v1710
      %v1731 = vmul.f32 %v1727, %v1711
      %v1732 = vadd.f32 %v1723, %v1730
      %v1733 = vadd.f32 %v1724, %v1731
      %1734 = vst [vmem:[#allocation1] ss:$4 sm:$0xff] %v182
      %v1735 = vld.sshfl [vmem:[#allocation1] sm:$0xff pattern:$0x73625140]
      %v1736 = vld.sshfl [vmem:[#allocation1 + $0x8] sm:$0xff pattern:$0x73625140]
      %1739 = vrot.lane.b32.xlu0 %v1735, 80
      %v1740 = vpop.permute.xlu0 %1739
      %1741 = vrot.lane.b32.xlu0 %v1736, 80
      %v1742 = vpop.permute.xlu0 %1741
      %vm1743 = vcmp.lt.s32.totalorder %v195, 80
      %v1744 = vsel %vm1743, %v1740, %v1742
      %v1745 = vsel %vm1743, %v1742, %v1740
      %1746 = vst [vmem:[#allocation1] ss:$4 sm:$0xff] %v183
      %v1747 = vld.sshfl [vmem:[#allocation1] sm:$0xff pattern:$0x73625140]
      %v1748 = vld.sshfl [vmem:[#allocation1 + $0x8] sm:$0xff pattern:$0x73625140]
      %1751 = vrot.lane.b32.xlu0 %v1747, 80
      %v1752 = vpop.permute.xlu0 %1751
      %1753 = vrot.lane.b32.xlu0 %v1748, 80
      %v1754 = vpop.permute.xlu0 %1753
      %v1755 = vsel %vm1743, %v1752, %v1754
      %v1756 = vsel %vm1743, %v1754, %v1752
      %1757 = vrot.lane.b32.xlu0 %v1744, 3
      %v1758 = vpop.permute.xlu0 %1757
      %1759 = vrot.lane.b32.xlu0 %v1745, 3
      %v1760 = vpop.permute.xlu0 %1759
      %v1761 = vsel %vm215, %v1758, %v1760
      %v1762 = vsel %vm215, %v1760, %v1758
      %1763 = vrot.lane.b32.xlu0 %v1755, 3
      %v1764 = vpop.permute.xlu0 %1763
      %1765 = vrot.lane.b32.xlu0 %v1756, 3
      %v1766 = vpop.permute.xlu0 %1765
      %v1767 = vsel %vm215, %v1764, %v1766
      %v1768 = vsel %vm215, %v1766, %v1764
      %s1769 = scalar_lea.vmem [#allocation4], 82
      %v1770 = vld [vmem:[%s1769] ss:$8 sm:$0x3]
      %s1771 = scalar_lea.vmem [#allocation4], 179
      %v1772 = vld [vmem:[%s1771] ss:$8 sm:$0x3]
      %v1774 = vperm.slane %v1770, 0
      %v1775 = vperm.slane %v1770, 1
      %v1778 = vmul.f32 %v1774, %v1762
      %v1779 = vmul.f32 %v1775, %v1761
      %v1780 = vadd.f32 %v1732, %v1778
      %v1781 = vadd.f32 %v1733, %v1779
      %v1783 = vperm.slane %v1772, 0
      %v1784 = vperm.slane %v1772, 1
      %v1787 = vmul.f32 %v1783, %v1768
      %v1788 = vmul.f32 %v1784, %v1767
      %v1789 = vadd.f32 %v1780, %v1787
      %v1790 = vadd.f32 %v1781, %v1788
      %1791 = vrot.lane.b32.xlu0 %v1744, 2
      %v1792 = vpop.permute.xlu0 %1791
      %1793 = vrot.lane.b32.xlu0 %v1745, 2
      %v1794 = vpop.permute.xlu0 %1793
      %v1795 = vsel %vm249, %v1792, %v1794
      %v1796 = vsel %vm249, %v1794, %v1792
      %1797 = vrot.lane.b32.xlu0 %v1755, 2
      %v1798 = vpop.permute.xlu0 %1797
      %1799 = vrot.lane.b32.xlu0 %v1756, 2
      %v1800 = vpop.permute.xlu0 %1799
      %v1801 = vsel %vm249, %v1798, %v1800
      %v1802 = vsel %vm249, %v1800, %v1798
      %s1803 = scalar_lea.vmem [#allocation4], 83
      %v1804 = vld [vmem:[%s1803] ss:$8 sm:$0x3]
      %s1805 = scalar_lea.vmem [#allocation4], 180
      %v1806 = vld [vmem:[%s1805] ss:$8 sm:$0x3]
      %v1808 = vperm.slane %v1804, 0
      %v1809 = vperm.slane %v1804, 1
      %v1812 = vmul.f32 %v1808, %v1796
      %v1813 = vmul.f32 %v1809, %v1795
      %v1814 = vadd.f32 %v1789, %v1812
      %v1815 = vadd.f32 %v1790, %v1813
      %v1817 = vperm.slane %v1806, 0
      %v1818 = vperm.slane %v1806, 1
      %v1821 = vmul.f32 %v1817, %v1802
      %v1822 = vmul.f32 %v1818, %v1801
      %v1823 = vadd.f32 %v1814, %v1821
      %v1824 = vadd.f32 %v1815, %v1822
      %1825 = vrot.lane.b32.xlu0 %v1744, 1
      %v1826 = vpop.permute.xlu0 %1825
      %1827 = vrot.lane.b32.xlu0 %v1745, 1
      %v1828 = vpop.permute.xlu0 %1827
      %v1829 = vsel %vm284, %v1826, %v1828
      %v1830 = vsel %vm284, %v1828, %v1826
      %1831 = vrot.lane.b32.xlu0 %v1755, 1
      %v1832 = vpop.permute.xlu0 %1831
      %1833 = vrot.lane.b32.xlu0 %v1756, 1
      %v1834 = vpop.permute.xlu0 %1833
      %v1835 = vsel %vm284, %v1832, %v1834
      %v1836 = vsel %vm284, %v1834, %v1832
      %s1837 = scalar_lea.vmem [#allocation4], 84
      %v1838 = vld [vmem:[%s1837] ss:$8 sm:$0x3]
      %s1839 = scalar_lea.vmem [#allocation4], 181
      %v1840 = vld [vmem:[%s1839] ss:$8 sm:$0x3]
      %v1842 = vperm.slane %v1838, 0
      %v1843 = vperm.slane %v1838, 1
      %v1846 = vmul.f32 %v1842, %v1830
      %v1847 = vmul.f32 %v1843, %v1829
      %v1848 = vadd.f32 %v1823, %v1846
      %v1849 = vadd.f32 %v1824, %v1847
      %v1851 = vperm.slane %v1840, 0
      %v1852 = vperm.slane %v1840, 1
      %v1855 = vmul.f32 %v1851, %v1836
      %v1856 = vmul.f32 %v1852, %v1835
      %v1857 = vadd.f32 %v1848, %v1855
      %v1858 = vadd.f32 %v1849, %v1856
      %s1859 = scalar_lea.vmem [#allocation4], 85
      %v1860 = vld [vmem:[%s1859] ss:$8 sm:$0x3]
      %s1861 = scalar_lea.vmem [#allocation4], 182
      %v1862 = vld [vmem:[%s1861] ss:$8 sm:$0x3]
      %v1864 = vperm.slane %v1860, 0
      %v1865 = vperm.slane %v1860, 1
      %v1868 = vmul.f32 %v1864, %v1744
      %v1869 = vmul.f32 %v1865, %v1745
      %v1870 = vadd.f32 %v1857, %v1868
      %v1871 = vadd.f32 %v1858, %v1869
      %v1873 = vperm.slane %v1862, 0
      %v1874 = vperm.slane %v1862, 1
      %v1877 = vmul.f32 %v1873, %v1755
      %v1878 = vmul.f32 %v1874, %v1756
      %v1879 = vadd.f32 %v1870, %v1877
      %v1880 = vadd.f32 %v1871, %v1878
      %1881 = vrot.lane.b32.xlu0 %v1744, 127
      %v1882 = vpop.permute.xlu0 %1881
      %1883 = vrot.lane.b32.xlu0 %v1745, 127
      %v1884 = vpop.permute.xlu0 %1883
      %v1885 = vsel %vm341, %v1882, %v1884
      %v1886 = vsel %vm341, %v1884, %v1882
      %1887 = vrot.lane.b32.xlu0 %v1755, 127
      %v1888 = vpop.permute.xlu0 %1887
      %1889 = vrot.lane.b32.xlu0 %v1756, 127
      %v1890 = vpop.permute.xlu0 %1889
      %v1891 = vsel %vm341, %v1888, %v1890
      %v1892 = vsel %vm341, %v1890, %v1888
      %s1893 = scalar_lea.vmem [#allocation4], 86
      %v1894 = vld [vmem:[%s1893] ss:$8 sm:$0x3]
      %s1895 = scalar_lea.vmem [#allocation4], 183
      %v1896 = vld [vmem:[%s1895] ss:$8 sm:$0x3]
      %v1898 = vperm.slane %v1894, 0
      %v1899 = vperm.slane %v1894, 1
      %v1902 = vmul.f32 %v1898, %v1885
      %v1903 = vmul.f32 %v1899, %v1886
      %v1904 = vadd.f32 %v1879, %v1902
      %v1905 = vadd.f32 %v1880, %v1903
      %v1907 = vperm.slane %v1896, 0
      %v1908 = vperm.slane %v1896, 1
      %v1911 = vmul.f32 %v1907, %v1891
      %v1912 = vmul.f32 %v1908, %v1892
      %v1913 = vadd.f32 %v1904, %v1911
      %v1914 = vadd.f32 %v1905, %v1912
      %1915 = vrot.lane.b32.xlu0 %v1744, 126
      %v1916 = vpop.permute.xlu0 %1915
      %1917 = vrot.lane.b32.xlu0 %v1745, 126
      %v1918 = vpop.permute.xlu0 %1917
      %v1919 = vsel %vm376, %v1916, %v1918
      %v1920 = vsel %vm376, %v1918, %v1916
      %1921 = vrot.lane.b32.xlu0 %v1755, 126
      %v1922 = vpop.permute.xlu0 %1921
      %1923 = vrot.lane.b32.xlu0 %v1756, 126
      %v1924 = vpop.permute.xlu0 %1923
      %v1925 = vsel %vm376, %v1922, %v1924
      %v1926 = vsel %vm376, %v1924, %v1922
      %s1927 = scalar_lea.vmem [#allocation4], 87
      %v1928 = vld [vmem:[%s1927] ss:$8 sm:$0x3]
      %s1929 = scalar_lea.vmem [#allocation4], 192
      %v1930 = vld [vmem:[%s1929] ss:$8 sm:$0x3]
      %v1932 = vperm.slane %v1928, 0
      %v1933 = vperm.slane %v1928, 1
      %v1936 = vmul.f32 %v1932, %v1919
      %v1937 = vmul.f32 %v1933, %v1920
      %v1938 = vadd.f32 %v1913, %v1936
      %v1939 = vadd.f32 %v1914, %v1937
      %v1941 = vperm.slane %v1930, 0
      %v1942 = vperm.slane %v1930, 1
      %v1945 = vmul.f32 %v1941, %v1925
      %v1946 = vmul.f32 %v1942, %v1926
      %v1947 = vadd.f32 %v1938, %v1945
      %v1948 = vadd.f32 %v1939, %v1946
      %1949 = vrot.lane.b32.xlu0 %v1744, 125
      %v1950 = vpop.permute.xlu0 %1949
      %1951 = vrot.lane.b32.xlu0 %v1745, 125
      %v1952 = vpop.permute.xlu0 %1951
      %v1953 = vsel %vm411, %v1950, %v1952
      %v1954 = vsel %vm411, %v1952, %v1950
      %1955 = vrot.lane.b32.xlu0 %v1755, 125
      %v1956 = vpop.permute.xlu0 %1955
      %1957 = vrot.lane.b32.xlu0 %v1756, 125
      %v1958 = vpop.permute.xlu0 %1957
      %v1959 = vsel %vm411, %v1956, %v1958
      %v1960 = vsel %vm411, %v1958, %v1956
      %s1961 = scalar_lea.vmem [#allocation4], 96
      %v1962 = vld [vmem:[%s1961] ss:$8 sm:$0x3]
      %s1963 = scalar_lea.vmem [#allocation4], 193
      %v1964 = vld [vmem:[%s1963] ss:$8 sm:$0x3]
      %v1966 = vperm.slane %v1962, 0
      %v1967 = vperm.slane %v1962, 1
      %v1970 = vmul.f32 %v1966, %v1953
      %v1971 = vmul.f32 %v1967, %v1954
      %v1972 = vadd.f32 %v1947, %v1970
      %v1973 = vadd.f32 %v1948, %v1971
      %v1975 = vperm.slane %v1964, 0
      %v1976 = vperm.slane %v1964, 1
      %v1979 = vmul.f32 %v1975, %v1959
      %v1980 = vmul.f32 %v1976, %v1960
      %v1981 = vadd.f32 %v1972, %v1979
      %v1982 = vadd.f32 %v1973, %v1980
      %v1983 = vxor.u32 %v1981, 2147483648
      %v1984 = vxor.u32 %v1982, 2147483648
      %v1985 = vmul.f32 %v1983, 1.442695
      %v1986 = vpow.pop %v1985
      %v1987 = vmul.f32 %v1984, 1.442695
      %v1988 = vpow.pop %v1987
      %v1989 = vadd.f32 %v1986, 1.0
      %v1990 = vadd.f32 %v1988, 1.0
      %v1991 = vrcp.pop %v1989
      %v1992 = vmul.f32 %v1989, %v1991
      %v1993 = vsub.f32 1.0, %v1992
      %v1994 = vmul.f32 %v1991, %v1993
      %v1995 = vadd.f32 %v1991, %v1994
      %vm1996 = vweird.f32 %v1989
      %vm1997 = vweird.f32 %v1991
      %vm1998 = vmor %vm1996, %vm1997
      %v1999 = vsel %vm1998, %v1991, %v1995
      %v2000 = vand.u32 2147483647, %v1989
      %vm2001 = vcmp.eq.f32.partialorder %v2000, 8.507059e+37
      %v2002 = vand.u32 %v1989, 2147483648
      %v2003 = vor.u32 1.1754944e-38, %v2002
      %v2004 = vsel %vm2001, %v2003, %v1999
      %v2005 = vmul.f32 1.0, %v2004
      %v2006 = vrcp.pop %v1990
      %v2007 = vmul.f32 %v1990, %v2006
      %v2008 = vsub.f32 1.0, %v2007
      %v2009 = vmul.f32 %v2006, %v2008
      %v2010 = vadd.f32 %v2006, %v2009
      %vm2011 = vweird.f32 %v1990
      %vm2012 = vweird.f32 %v2006
      %vm2013 = vmor %vm2011, %vm2012
      %v2014 = vsel %vm2013, %v2006, %v2010
      %v2015 = vand.u32 2147483647, %v1990
      %vm2016 = vcmp.eq.f32.partialorder %v2015, 8.507059e+37
      %v2017 = vand.u32 %v1990, 2147483648
      %v2018 = vor.u32 1.1754944e-38, %v2017
      %v2019 = vsel %vm2016, %v2018, %v2014
      %v2020 = vmul.f32 1.0, %v2019
      %v2023 = vrot.slane %v2020, 7
      %vm2024 = vcmask 1040384
      %v2025 = vsel %vm2024, %v2005, %v2023
      %v2026 = vsel %vm109, %v2005, %v2023
      %v2027 = vrot.slane %v2026, 1
      %v2030 = vlaneseq
      %vm2031 = vcmp.ge.s32.totalorder %v2030, 0
      %vm2032 = vcmp.lt.s32.totalorder %v2030, 256
      %vm2033 = vmand %vm2031, %vm2032
      %2034 = vst.msk [vmem:[#allocation9] sm:$0x3] %vm2033, %v2025
      %2035 = vst.msk [vmem:[#allocation9 + $0x2] sm:$0x3] %vm2033, %v2027
    $region25: #{tpu_custom_call.1} parent=1 // pred_fallthru
      _
    // Predicated region
    $region26: #{tpu_custom_call.1} parent=1 // pred_check
      _
    $region27: #{tpu_custom_call.1} parent=1 // pred_check_branch
      %2037 = sbr.rel (0) target = $region29
    $region28: #{tpu_custom_call.1} parent=1 // pred_region
      %2039 = vsyncadd [#allocation6], 0
      %s2040 = sshll.u32 [#allocation9], 4
      %s2041 = int_to_ptr.vmem [resolvable:$true] %s2040
      %s2042 = sshll.u32 %s2, 4
      %s2043 = int_to_ptr.hbm [resolvable:$true] %s2042
      %2048 = dma.vmem_to_hbm [thread:$0]  %s2041, 64, %s2043, [#allocation6], 32, 32, 2
    $region29: #{tpu_custom_call.1} parent=1 // pred_fallthru
      _
    // Predicated region
    $region30: #{tpu_custom_call.1} parent=1 // pred_check
      _
    $region31: #{tpu_custom_call.1} parent=1 // pred_check_branch
      %2050 = sbr.rel (0) target = $region33
    $region32: #{tpu_custom_call.1} parent=1 // pred_region
      %2052 = dma.done [#allocation6], 64
    $region33: #{tpu_custom_call.1} parent=1 // pred_fallthru
      _
    %2053 = vsyncpa [#allocation5], 1
    %2054 = vsyncpa [#allocation8], 1
    %2055 = vsyncpa [#allocation6], 1

</llo_original>
